<compile_context>
chip_gen: v6e
topology: v6e:2x2x1
jax: 0.10.0
libtpu: 0.0.40
codegen_flags: <defaults>
</compile_context>

<pallas_src>
import math

import jax
import jax.numpy as jnp
from jax.experimental import pallas as pl
from jax.experimental.pallas import tpu as pltpu


# --------------------------------------------------------------------------
# Small helpers
# --------------------------------------------------------------------------
def _cdiv(a, b):
    return -(-a // b)


def _round_up(x, m):
    return _cdiv(x, m) * m


def _pad2d(x, rows, cols):
    r, c = x.shape
    if r == rows and c == cols:
        return x
    return jnp.pad(x, ((0, rows - r), (0, cols - c)))


def _tile_plan(n, unit, target, min_blocks=1):
    """Pick (tile, padded_total): tile % unit == 0, padded_total = tile * nblocks >= n,
    minimizing padding (ties -> fewer / larger blocks).  `min_blocks` asks for at
    least that many blocks (megacore balance) when `n` is large enough."""
    aligned = _round_up(n, unit)
    lo = max(min_blocks, _cdiv(aligned, max(target, unit)))
    lo = min(lo, max(1, aligned // unit))  # no more blocks than unit-rows available
    best = None
    for nb in range(lo, lo + 4):
        tile = _round_up(_cdiv(aligned, nb), unit)
        cand = (tile * nb, nb, tile)       # minimize padding, then block count
        if best is None or cand < best:
            best = cand
    return best[2], best[0]


def _vmem_limit(vmem_est):
    """Generation-aware scoped-VMEM limit: ~80% of physical capacity."""
    try:
        cap = int(getattr(pltpu.get_tpu_info(), "vmem_capacity_bytes",
                          128 * 1024 * 1024))
    except Exception:
        cap = 128 * 1024 * 1024
    want = max(2 * int(vmem_est), 32 * 1024 * 1024)
    return int(min(want, int(0.8 * cap)))


# --------------------------------------------------------------------------
# Fused kernel: out = (adj @ feat) @ weight, grid = (row blocks, adj-col blocks)
# --------------------------------------------------------------------------
def _fused_decoder_kernel(adj_ref, feat_ref, w_ref, o_ref, acc_ref):
    k = pl.program_id(1)

    @pl.when(k == 0)
    def _():
        acc_ref[...] = jnp.zeros_like(acc_ref)

    # bf16 x bf16 -> f32 accumulate on the MXU (the dominant contraction).
    acc_ref[...] += jnp.dot(
        adj_ref[...], feat_ref[...], preferred_element_type=jnp.float32
    )

    @pl.when(k == pl.num_programs(1) - 1)
    def _():
        # Small epilogue projection with the resident bf16 weight (MXU-native),
        # f32 accumulation, f32 store.
        o_ref[...] = jnp.dot(
            acc_ref[...].astype(jnp.bfloat16),
            w_ref[...],
            preferred_element_type=jnp.float32,
        ).astype(o_ref.dtype)


def fused_decoder(adj, feat, weight, *, tm_target=512, tk_target=768):
    N, f_in = feat.shape
    assert adj.shape == (N, N)
    f_in2, f_out = weight.shape
    assert f_in2 == f_in

    # Row tile: bf16 sublane packing unit is 16; ask for >= 2 balanced row blocks
    # so both v7x TensorCores get real work on the "parallel" axis.
    tm, mp = _tile_plan(N, 16, tm_target, min_blocks=2)
    tk, kp = _tile_plan(N, 128, tk_target)
    fi_p = _round_up(f_in, 128)
    fo_p = _round_up(f_out, 128)      # lane-dense output

    adj_p = _pad2d(adj, mp, kp).astype(jnp.bfloat16)
    feat_p = _pad2d(feat, kp, fi_p).astype(jnp.bfloat16)
    w_p = _pad2d(weight, fi_p, fo_p).astype(jnp.bfloat16)

    nk = kp // tk
    adj_buffers = 3 if nk >= 3 else 2  # deeper buffering hides HBM jitter on long reductions

    vmem_est = (
        adj_buffers * tm * tk * 2     # adj tiles (bf16)
        + 2 * tk * fi_p * 2           # feat tiles (bf16, double buffered)
        + fi_p * fo_p * 2             # resident weight (bf16, single buffer)
        + 2 * tm * fo_p * 4           # f32 output tiles
        + tm * fi_p * 4               # f32 accumulator scratch
    )

    def _call(use_pipeline_modes):
        if use_pipeline_modes:
            adj_spec = pl.BlockSpec((tm, tk), lambda i, k: (i, k),
                                    pipeline_mode=pl.Buffered(adj_buffers))
            w_spec = pl.BlockSpec((fi_p, fo_p), lambda i, k: (0, 0),
                                  pipeline_mode=pl.Buffered(1))
        else:
            adj_spec = pl.BlockSpec((tm, tk), lambda i, k: (i, k))
            w_spec = pl.BlockSpec((fi_p, fo_p), lambda i, k: (0, 0))
        return pl.pallas_call(
            _fused_decoder_kernel,
            out_shape=jax.ShapeDtypeStruct((mp, fo_p), jnp.float32),
            grid_spec=pltpu.PrefetchScalarGridSpec(
                num_scalar_prefetch=0,
                grid=(mp // tm, nk),
                in_specs=[
                    adj_spec,                                       # adj row-block
                    pl.BlockSpec((tk, fi_p), lambda i, k: (k, 0)),  # feat block
                    w_spec,                                         # weight resident
                ],
                out_specs=pl.BlockSpec((tm, fo_p), lambda i, k: (i, 0)),
                scratch_shapes=[pltpu.VMEM((tm, fi_p), jnp.float32)],
            ),
            compiler_params=pltpu.CompilerParams(
                dimension_semantics=("parallel", "arbitrary"),
                vmem_limit_bytes=_vmem_limit(vmem_est),
            ),
        )(adj_p, feat_p, w_p)

    try:
        out = _call(True)
    except Exception:
        # pipeline_mode / custom buffer counts unsupported on this jax build;
        # the default double-buffered pipeline is functionally identical.
        out = _call(False)
    return out[:N, :f_out]


# --------------------------------------------------------------------------
# Generic tiled matmul (fallback path): f32 VMEM accumulator, cast-on-last-k
# epilogue so the intermediate can be emitted directly in bf16.
# --------------------------------------------------------------------------
def _matmul_kernel(a_ref, b_ref, o_ref, acc_ref):
    k = pl.program_id(2)

    @pl.when(k == 0)
    def _():
        acc_ref[...] = jnp.zeros_like(acc_ref)

    acc_ref[...] += jnp.dot(a_ref[...], b_ref[...],
                            preferred_element_type=jnp.float32)

    @pl.when(k == pl.num_programs(2) - 1)
    def _():
        o_ref[...] = acc_ref[...].astype(o_ref.dtype)


def pallas_matmul(a, b, *, out_dtype=jnp.float32,
                  tm_target=512, tn_target=512, tk_target=1024):
    M, K = a.shape
    K2, Nc = b.shape
    assert K == K2

    tm, mp = _tile_plan(M, 16, tm_target)     # bf16 sublane packing unit
    tn, np_, = _tile_plan(Nc, 128, tn_target)
    tk, kp = _tile_plan(K, 128, tk_target)

    a_p = _pad2d(a, mp, kp).astype(jnp.bfloat16)
    b_p = _pad2d(b, kp, np_).astype(jnp.bfloat16)

    out_isz = jnp.dtype(out_dtype).itemsize
    vmem_est = (2 * tm * tk * 2 + 2 * tk * tn * 2
                + 2 * tm * tn * out_isz + tm * tn * 4)

    out = pl.pallas_call(
        _matmul_kernel,
        out_shape=jax.ShapeDtypeStruct((mp, np_), out_dtype),
        grid_spec=pltpu.PrefetchScalarGridSpec(
            num_scalar_prefetch=0,
            grid=(mp // tm, np_ // tn, kp // tk),
            in_specs=[
                pl.BlockSpec((tm, tk), lambda i, j, k: (i, k)),
                pl.BlockSpec((tk, tn), lambda i, j, k: (k, j)),
            ],
            out_specs=pl.BlockSpec((tm, tn), lambda i, j, k: (i, j)),
            scratch_shapes=[pltpu.VMEM((tm, tn), jnp.float32)],
        ),
        compiler_params=pltpu.CompilerParams(
            dimension_semantics=("parallel", "parallel", "arbitrary"),
            vmem_limit_bytes=_vmem_limit(vmem_est),
        ),
    )(a_p, b_p)
    return out[:M, :Nc]


# --------------------------------------------------------------------------
# Decoder.forward
# --------------------------------------------------------------------------
def decoder_forward(feat, adj, weight):
    """Decoder.forward: spmm(adj, feat @ weight) == (adj @ feat) @ weight."""
    N, f_in = feat.shape
    f_out = weight.shape[1]
    fi_p = _round_up(f_in, 128)
    fo_p = _round_up(f_out, 128)
    # Compare MXU passes at 256-lane width (v6e/v7x); prefer the fused
    # re-associated order on ties since it saves the intermediate HBM round
    # trip.  (On v5e's 128-wide MXU this is still a sound ordering heuristic.)
    if _cdiv(fi_p, 256) <= _cdiv(fo_p, 256):
        return fused_decoder(adj, feat, weight)
    # Fallback: h = feat @ weight first, emitted in bf16 straight from the f32
    # accumulator (no f32 HBM write + convert pass), then out = adj @ h.
    h = pallas_matmul(feat, weight, out_dtype=jnp.bfloat16)
    return pallas_matmul(adj, h, out_dtype=jnp.float32)


def xavier_uniform(key, shape, dtype=jnp.float32):
    fan_in, fan_out = shape
    bound = math.sqrt(6.0 / (fan_in + fan_out))
    return jax.random.uniform(key, shape, dtype, minval=-bound, maxval=bound)


if __name__ == "__main__":
    key = jax.random.PRNGKey(0)
    k_f1, k_a1, k_w1, k_f2, k_a2, k_w2 = jax.random.split(key, 6)

    # --- Primary (fused) path: latent dim < gene dim, non-128-multiple shapes ---
    N, in_feat, out_feat = 300, 96, 200
    feat = jax.random.normal(k_f1, (N, in_feat), dtype=jnp.float32)
    adj_raw = jax.random.uniform(k_a1, (N, N), dtype=jnp.float32)
    adj = adj_raw / jnp.sum(adj_raw, axis=1, keepdims=True)  # dense stand-in for sparse adj
    weight = xavier_uniform(k_w1, (in_feat, out_feat))

    out = jax.block_until_ready(decoder_forward(feat, adj, weight))
    # Reference in torch's op order (feat @ W, then adj @ x), full precision.
    # Note: the fused kernel re-associates the product; exact FP summation order
    # differs, comparison is within tolerance.
    ref = jnp.dot(adj, jnp.dot(feat, weight, precision="highest"),
                  precision="highest")
    assert out.shape == (N, out_feat)
    assert bool(jnp.allclose(out, ref, atol=1e-2, rtol=2e-2))

    # --- Fallback path (wide latent, narrow output): two fused-epilogue matmuls ---
    N2, in2, out2 = 128, 384, 64
    feat2 = jax.random.normal(k_f2, (N2, in2), dtype=jnp.float32)
    adj2_raw = jax.random.uniform(k_a2, (N2, N2), dtype=jnp.float32)
    adj2 = adj2_raw / jnp.sum(adj2_raw, axis=1, keepdims=True)
    weight2 = xavier_uniform(k_w2, (in2, out2))

    out2_arr = jax.block_until_ready(decoder_forward(feat2, adj2, weight2))
    ref2 = jnp.dot(adj2, jnp.dot(feat2, weight2, precision="highest"),
                   precision="highest")
    assert out2_arr.shape == (N2, out2)
    assert bool(jnp.allclose(out2_arr, ref2, atol=1e-2, rtol=2e-2))

    print("KERNEL_OK")
</pallas_src>

<mosaic_0001>
module attributes {stable_mosaic.version = 11 : i64} {
  func.func @_fused_decoder_kernel(%arg0: i32, %arg1: i32, %arg2: memref<160x384xbf16, #tpu.memory_space<vmem>>, %arg3: memref<384x128xbf16, #tpu.memory_space<vmem>>, %arg4: memref<128x256xbf16, #tpu.memory_space<vmem>>, %arg5: memref<160x256xf32, #tpu.memory_space<vmem>>, %arg6: memref<160x128xf32, #tpu.memory_space<vmem>>) attributes {dimension_semantics = [#tpu.dimension_semantics<parallel>, #tpu.dimension_semantics<arbitrary>], iteration_bounds = array<i64: 2, 1>, scalar_prefetch = 0 : i64, scratch_operands = 1 : i64, tpu.core_type = #tpu.core_type<tc>, window_params = [{pipeline_mode = #tpu.pipeline_mode<double_buffered>, transform_indices = @transform_0, window_bounds = array<i64: 160, 384>}, {transform_indices = @transform_1, window_bounds = array<i64: 384, 128>}, {pipeline_mode = #tpu.pipeline_mode<synchronous>, transform_indices = @transform_2, window_bounds = array<i64: 128, 256>}, {transform_indices = @transform_3, window_bounds = array<i64: 160, 256>}]} {
    %c0_i32 = arith.constant 0 : i32
    %0 = arith.cmpi eq, %arg1, %c0_i32 : i32
    %1 = arith.extui %0 : i1 to i32
    %c0_i32_0 = arith.constant 0 : i32
    %2 = arith.cmpi ne, %1, %c0_i32_0 : i32
    scf.if %2 {
      %cst_10 = arith.constant 0.000000e+00 : f32
      %12 = vector.broadcast %cst_10 : f32 to vector<160x128xf32>
      %c0_11 = arith.constant 0 : index
      %c0_12 = arith.constant 0 : index
      %13 = vector.load %arg6[%c0_11, %c0_12] : memref<160x128xf32, #tpu.memory_space<vmem>>, vector<160x128xf32>
      tpu.vector_store %arg6[%c0_11, %c0_12], %12 {strides = array<i32>} : memref<160x128xf32, #tpu.memory_space<vmem>>, vector<160x128xf32>,
    } else {
    }
    %c0 = arith.constant 0 : index
    %c0_1 = arith.constant 0 : index
    %3 = vector.load %arg6[%c0, %c0_1] : memref<160x128xf32, #tpu.memory_space<vmem>>, vector<160x128xf32>
    %c0_2 = arith.constant 0 : index
    %c0_3 = arith.constant 0 : index
    %4 = vector.load %arg2[%c0_2, %c0_3] : memref<160x384xbf16, #tpu.memory_space<vmem>>, vector<160x384xbf16>
    %c0_4 = arith.constant 0 : index
    %c0_5 = arith.constant 0 : index
    %5 = vector.load %arg3[%c0_4, %c0_5] : memref<384x128xbf16, #tpu.memory_space<vmem>>, vector<384x128xbf16>
    %cst = arith.constant dense<0.000000e+00> : vector<160x128xf32>
    %6 = tpu.matmul %4, %5, %cst {dimension_numbers = #tpu.dot_dimension_numbers<[1], [0], [0], [1], [0, 0, 1, 1], [], []>} : vector<160x384xbf16>, vector<384x128xbf16>, vector<160x128xf32> -> vector<160x128xf32>
    %7 = arith.addf %3, %6 : vector<160x128xf32>
    %c0_6 = arith.constant 0 : index
    %c0_7 = arith.constant 0 : index
    %8 = vector.load %arg6[%c0_6, %c0_7] : memref<160x128xf32, #tpu.memory_space<vmem>>, vector<160x128xf32>
    tpu.vector_store %arg6[%c0_6, %c0_7], %7 {strides = array<i32>} : memref<160x128xf32, #tpu.memory_space<vmem>>, vector<160x128xf32>,
    %c0_i32_8 = arith.constant 0 : i32
    %9 = arith.cmpi eq, %arg1, %c0_i32_8 : i32
    %10 = arith.extui %9 : i1 to i32
    %c0_i32_9 = arith.constant 0 : i32
    %11 = arith.cmpi ne, %10, %c0_i32_9 : i32
    scf.if %11 {
      %c0_10 = arith.constant 0 : index
      %c0_11 = arith.constant 0 : index
      %12 = vector.load %arg6[%c0_10, %c0_11] : memref<160x128xf32, #tpu.memory_space<vmem>>, vector<160x128xf32>
      %13 = arith.truncf %12 : vector<160x128xf32> to vector<160x128xbf16>
      %c0_12 = arith.constant 0 : index
      %c0_13 = arith.constant 0 : index
      %14 = vector.load %arg4[%c0_12, %c0_13] : memref<128x256xbf16, #tpu.memory_space<vmem>>, vector<128x256xbf16>
      %cst_14 = arith.constant dense<0.000000e+00> : vector<160x256xf32>
      %15 = tpu.matmul %13, %14, %cst_14 {dimension_numbers = #tpu.dot_dimension_numbers<[1], [0], [0], [1], [0, 0, 1, 1], [], []>} : vector<160x128xbf16>, vector<128x256xbf16>, vector<160x256xf32> -> vector<160x256xf32>
      %c0_15 = arith.constant 0 : index
      %c0_16 = arith.constant 0 : index
      %16 = vector.load %arg5[%c0_15, %c0_16] : memref<160x256xf32, #tpu.memory_space<vmem>>, vector<160x256xf32>
      tpu.vector_store %arg5[%c0_15, %c0_16], %15 {strides = array<i32>} : memref<160x256xf32, #tpu.memory_space<vmem>>, vector<160x256xf32>,
    } else {
    }
    return
  }
  func.func @transform_0(%arg0: i32, %arg1: i32) -> (i32, i32) {
    %c0_i32 = arith.constant 0 : i32
    return %arg0, %arg1 : i32, i32
  }
  func.func @transform_1(%arg0: i32, %arg1: i32) -> (i32, i32) {
    %c0_i32 = arith.constant 0 : i32
    %c0_i32_0 = arith.constant 0 : i32
    return %arg1, %c0_i32 : i32, i32
  }
  func.func @transform_2(%arg0: i32, %arg1: i32) -> (i32, i32) {
    %c0_i32 = arith.constant 0 : i32
    %c0_i32_0 = arith.constant 0 : i32
    %c0_i32_1 = arith.constant 0 : i32
    return %c0_i32, %c0_i32_0 : i32, i32
  }
  func.func @transform_3(%arg0: i32, %arg1: i32) -> (i32, i32) {
    %c0_i32 = arith.constant 0 : i32
    %c0_i32_0 = arith.constant 0 : i32
    return %arg0, %c0_i32 : i32, i32
  }
}

module attributes {stable_mosaic.version = 11 : i64} {
  func.func @_fused_decoder_kernel(%arg0: i32, %arg1: i32, %arg2: memref<160x384xbf16, #tpu.memory_space<vmem>>, %arg3: memref<384x128xbf16, #tpu.memory_space<vmem>>, %arg4: memref<128x256xbf16, #tpu.memory_space<vmem>>, %arg5: memref<160x256xf32, #tpu.memory_space<vmem>>, %arg6: memref<160x128xf32, #tpu.memory_space<vmem>>) attributes {dimension_semantics = [#tpu.dimension_semantics<parallel>, #tpu.dimension_semantics<arbitrary>], iteration_bounds = array<i64: 2, 1>, scalar_prefetch = 0 : i64, scratch_operands = 1 : i64, tpu.core_type = #tpu.core_type<tc>, window_params = [{transform_indices = @transform_0, window_bounds = array<i64: 160, 384>}, {transform_indices = @transform_1, window_bounds = array<i64: 384, 128>}, {pipeline_mode = #tpu.pipeline_mode<synchronous>, transform_indices = @transform_2, window_bounds = array<i64: 128, 256>}, {transform_indices = @transform_3, window_bounds = array<i64: 160, 256>}]} {
    %c0_i32 = arith.constant 0 : i32
    %0 = arith.cmpi eq, %arg1, %c0_i32 : i32
    %1 = arith.extui %0 : i1 to i32
    %c0_i32_0 = arith.constant 0 : i32
    %2 = arith.cmpi ne, %1, %c0_i32_0 : i32
    scf.if %2 {
      %cst_10 = arith.constant 0.000000e+00 : f32
      %12 = vector.broadcast %cst_10 : f32 to vector<160x128xf32>
      %c0_11 = arith.constant 0 : index
      %c0_12 = arith.constant 0 : index
      %13 = vector.load %arg6[%c0_11, %c0_12] : memref<160x128xf32, #tpu.memory_space<vmem>>, vector<160x128xf32>
      tpu.vector_store %arg6[%c0_11, %c0_12], %12 {strides = array<i32>} : memref<160x128xf32, #tpu.memory_space<vmem>>, vector<160x128xf32>,
    } else {
    }
    %c0 = arith.constant 0 : index
    %c0_1 = arith.constant 0 : index
    %3 = vector.load %arg6[%c0, %c0_1] : memref<160x128xf32, #tpu.memory_space<vmem>>, vector<160x128xf32>
    %c0_2 = arith.constant 0 : index
    %c0_3 = arith.constant 0 : index
    %4 = vector.load %arg2[%c0_2, %c0_3] : memref<160x384xbf16, #tpu.memory_space<vmem>>, vector<160x384xbf16>
    %c0_4 = arith.constant 0 : index
    %c0_5 = arith.constant 0 : index
    %5 = vector.load %arg3[%c0_4, %c0_5] : memref<384x128xbf16, #tpu.memory_space<vmem>>, vector<384x128xbf16>
    %cst = arith.constant dense<0.000000e+00> : vector<160x128xf32>
    %6 = tpu.matmul %4, %5, %cst {dimension_numbers = #tpu.dot_dimension_numbers<[1], [0], [0], [1], [0, 0, 1, 1], [], []>} : vector<160x384xbf16>, vector<384x128xbf16>, vector<160x128xf32> -> vector<160x128xf32>
    %7 = arith.addf %3, %6 : vector<160x128xf32>
    %c0_6 = arith.constant 0 : index
    %c0_7 = arith.constant 0 : index
    %8 = vector.load %arg6[%c0_6, %c0_7] : memref<160x128xf32, #tpu.memory_space<vmem>>, vector<160x128xf32>
    tpu.vector_store %arg6[%c0_6, %c0_7], %7 {strides = array<i32>} : memref<160x128xf32, #tpu.memory_space<vmem>>, vector<160x128xf32>,
    %c0_i32_8 = arith.constant 0 : i32
    %9 = arith.cmpi eq, %arg1, %c0_i32_8 : i32
    %10 = arith.extui %9 : i1 to i32
    %c0_i32_9 = arith.constant 0 : i32
    %11 = arith.cmpi ne, %10, %c0_i32_9 : i32
    scf.if %11 {
      %c0_10 = arith.constant 0 : index
      %c0_11 = arith.constant 0 : index
      %12 = vector.load %arg6[%c0_10, %c0_11] : memref<160x128xf32, #tpu.memory_space<vmem>>, vector<160x128xf32>
      %13 = arith.truncf %12 : vector<160x128xf32> to vector<160x128xbf16>
      %c0_12 = arith.constant 0 : index
      %c0_13 = arith.constant 0 : index
      %14 = vector.load %arg4[%c0_12, %c0_13] : memref<128x256xbf16, #tpu.memory_space<vmem>>, vector<128x256xbf16>
      %cst_14 = arith.constant dense<0.000000e+00> : vector<160x256xf32>
      %15 = tpu.matmul %13, %14, %cst_14 {dimension_numbers = #tpu.dot_dimension_numbers<[1], [0], [0], [1], [0, 0, 1, 1], [], []>} : vector<160x128xbf16>, vector<128x256xbf16>, vector<160x256xf32> -> vector<160x256xf32>
      %c0_15 = arith.constant 0 : index
      %c0_16 = arith.constant 0 : index
      %16 = vector.load %arg5[%c0_15, %c0_16] : memref<160x256xf32, #tpu.memory_space<vmem>>, vector<160x256xf32>
      tpu.vector_store %arg5[%c0_15, %c0_16], %15 {strides = array<i32>} : memref<160x256xf32, #tpu.memory_space<vmem>>, vector<160x256xf32>,
    } else {
    }
    return
  }
  func.func @transform_0(%arg0: i32, %arg1: i32) -> (i32, i32) {
    %c0_i32 = arith.constant 0 : i32
    return %arg0, %arg1 : i32, i32
  }
  func.func @transform_1(%arg0: i32, %arg1: i32) -> (i32, i32) {
    %c0_i32 = arith.constant 0 : i32
    %c0_i32_0 = arith.constant 0 : i32
    return %arg1, %c0_i32 : i32, i32
  }
  func.func @transform_2(%arg0: i32, %arg1: i32) -> (i32, i32) {
    %c0_i32 = arith.constant 0 : i32
    %c0_i32_0 = arith.constant 0 : i32
    %c0_i32_1 = arith.constant 0 : i32
    return %c0_i32, %c0_i32_0 : i32, i32
  }
  func.func @transform_3(%arg0: i32, %arg1: i32) -> (i32, i32) {
    %c0_i32 = arith.constant 0 : i32
    %c0_i32_0 = arith.constant 0 : i32
    return %arg0, %c0_i32 : i32, i32
  }
}

</mosaic_0001>

<llo_original>
// kernel: tpu_custom_call.1
$region0: #{tpu_custom_call.1}
  #allocation0 [shape = 'u32[]', space=smem, size = 0x4, offset = 0x4, fixed_abs, tag = 'smem constant byte address 0x4 - core index']
  #allocation1 [shape = 'u32[144,128]{1,0:T(1,128)}', space=vmem, size = 0x12000, scoped, tag = 'internal scratch']
  #allocation2 [shape = 'f32[160,128]{1,0:T(8,128)}', space=vmem, size = 0x14000, scoped, tag = 'scratch operand']
  %s0 = inlined_call_operand.hbm [shape: bf16[320,384], index: 0, kind: input, shape index: {}]
  %s1 = inlined_call_operand.hbm [shape: bf16[384,128], index: 1, kind: input, shape index: {}]
  %s2 = inlined_call_operand.hbm [shape: bf16[128,256], index: 2, kind: input, shape index: {}]
  %s3 = inlined_call_operand.hbm [shape: f32[320,256], index: 3, kind: output, shape index: {}]
  %s4 = sld [smem:[#allocation0]]
  $region65: #{tpu_custom_call.1} parent=0
    _
  %s6 = ssub.s32 1, %s4
  %s7 = scalar_select 0, %s6, %s4
  $region1: #{tpu_custom_call.1} parent=0
    #allocation3 [shape = 'u8[245760]{0}', space=vmem, size = 0x3c000, scoped, tag = 'input window, operand 0']
    #allocation4 [shape = 's32[2]{0}', space=sflag, size = 0x8, scoped, tag = 'scoped memory for tpu_custom_call.1']
    #allocation5 [shape = 's32[2]{0}', space=sflag, size = 0x8, scoped, tag = 'scoped memory for tpu_custom_call.1']
    #allocation6 [shape = 'u8[98304]{0}', space=vmem, size = 0x18000, scoped, tag = 'input window, operand 1, single buffered']
    #allocation7 [shape = 's32[1]{0}', space=sflag, size = 0x4, scoped, tag = 'scoped memory for tpu_custom_call.1']
    #allocation8 [shape = 'u8[65536]{0}', space=vmem, size = 0x10000, scoped, tag = 'input window, operand 2, single buffered']
    #allocation9 [shape = 'u8[327680]{0}', space=vmem, size = 0x50000, scoped, tag = 'output window, operand 0']
    %8 = vsyncpa [#allocation4], 0
    %s9 = scalar_lea.sflag [#allocation4], 1
    %10 = vsyncpa %s9, 0
    %11 = vsyncpa [#allocation7], 0
    %12 = vsyncpa [#allocation5], 0
    %s13 = scalar_lea.sflag [#allocation5], 1
    %14 = vsyncpa %s13, 0
    loop: start=0, step=1, limit=4
    $region2: #{tpu_custom_call.1} parent=1 // loop_pre_header
      _
    $region3: #{tpu_custom_call.1} parent=1 // loop_header
      %s16 = sphi 0, %s20
      %p17 = scmp.ge.s32.totalorder %s16, 4
      %s23 = sphi 0, %s35
      %s24 = sphi 0, %s31
      %s25 = sphi 0, %s23
      %s26 = sphi 0, %s24
      %s27 = sphi 0, %s25
      %s28 = sphi 0, %s26
      %s40 = sphi 0, %s42
      %s43 = sphi 0, %s40
      %s44 = sphi 0, %s43
      %s60 = sphi 0, %s44
      %s66 = sphi 0, %s68
      %s69 = sphi 0, %s66
      %s70 = sphi 0, %s69
      %s86 = sphi 0, %s70
      %s90 = sphi 0, %s90
      %s92 = sphi 0, %s90
      %s93 = sphi 0, %s92
      %s107 = sphi 0, %s93
      %s113 = sphi 0, %s115
      %s116 = sphi 0, %s113
      %s117 = sphi 0, %s116
      %s133 = sphi 0, %s117
    $region4: #{tpu_custom_call.1} parent=1 // loop_header_branch
      %19 = sbr.rel (%p17) target = $region8
    $region5: #{tpu_custom_call.1} parent=1 // loop_body
      %s21 = ssub.s32 %s16, 1
      %s22 = ssub.s32 %s16, 2
      %s29 = sadd.s32 1, %s24
      %p30 = scmp.ge.s32.totalorder %s29, 1
      %s31 = scalar_select %p30, 0, %s29
      %s32 = sadd.s32 1, %s23
      %s33 = scalar_select %p30, %s32, %s23
      %p34 = scmp.ge.s32.totalorder %s33, 2
      %s35 = scalar_select %p34, 0, %s33
      %s36 = ssub.s32 %s23, %s35
      %s37 = ssub.s32 %s24, %s31
      %s38 = sor.u32 %s36, %s37
      %p39 = scmp.eq.s32.totalorder %s38, 0
      %s41 = sadd.s32 %s40, 1
      %s42 = scalar_select %p39, %s40, %s41
      %p45 = pneg %p39
      %p46 = scmp.eq.s32.totalorder %s16, 1
      %p47 = por %p45, %p46
      %p48 = scmp.ne.s32.totalorder %s40, %s43
      %p49 = scmp.eq.s32.totalorder %s16, 0
      %p50 = por %p48, %p49
      %p51 = scmp.ne.s32.totalorder %s40, %s43
      %p52 = scmp.eq.s32.totalorder %s21, 1
      %p53 = por %p51, %p52
      %p54 = scmp.ne.s32.totalorder %s43, %s44
      %p55 = scmp.eq.s32.totalorder %s21, 0
      %p56 = por %p54, %p55
      %p57 = scmp.ne.s32.totalorder %s43, %s44
      %p58 = scmp.eq.s32.totalorder %s22, 1
      %p59 = por %p57, %p58
      %p61 = scmp.ne.s32.totalorder %s44, %s60
      %p62 = scmp.eq.s32.totalorder %s22, 0
      %p63 = por %p61, %p62
      %s64 = ssub.s32 %s24, %s31
      %p65 = scmp.eq.s32.totalorder %s64, 0
      %s67 = sadd.s32 %s66, 1
      %s68 = scalar_select %p65, %s66, %s67
      %p71 = pneg %p65
      %p72 = scmp.eq.s32.totalorder %s16, 1
      %p73 = por %p71, %p72
      %p74 = scmp.ne.s32.totalorder %s66, %s69
      %p75 = scmp.eq.s32.totalorder %s16, 0
      %p76 = por %p74, %p75
      %p77 = scmp.ne.s32.totalorder %s66, %s69
      %p78 = scmp.eq.s32.totalorder %s21, 1
      %p79 = por %p77, %p78
      %p80 = scmp.ne.s32.totalorder %s69, %s70
      %p81 = scmp.eq.s32.totalorder %s21, 0
      %p82 = por %p80, %p81
      %p83 = scmp.ne.s32.totalorder %s69, %s70
      %p84 = scmp.eq.s32.totalorder %s22, 1
      %p85 = por %p83, %p84
      %p87 = scmp.ne.s32.totalorder %s70, %s86
      %p88 = scmp.eq.s32.totalorder %s22, 0
      %p89 = por %p87, %p88
      %s91 = sadd.s32 %s90, 1
      %p94 = scmp.eq.s32.totalorder %s16, 1
      %p95 = scmp.ne.s32.totalorder %s90, %s92
      %p96 = scmp.eq.s32.totalorder %s16, 0
      %p97 = por %p95, %p96
      %p98 = scmp.ne.s32.totalorder %s90, %s92
      %p99 = scmp.eq.s32.totalorder %s21, 1
      %p100 = por %p98, %p99
      %p101 = scmp.ne.s32.totalorder %s92, %s93
      %p102 = scmp.eq.s32.totalorder %s21, 0
      %p103 = por %p101, %p102
      %p104 = scmp.ne.s32.totalorder %s92, %s93
      %p105 = scmp.eq.s32.totalorder %s22, 1
      %p106 = por %p104, %p105
      %p108 = scmp.ne.s32.totalorder %s93, %s107
      %p109 = scmp.eq.s32.totalorder %s22, 0
      %p110 = por %p108, %p109
      %s111 = ssub.s32 %s23, %s35
      %p112 = scmp.eq.s32.totalorder %s111, 0
      %s114 = sadd.s32 %s113, 1
      %s115 = scalar_select %p112, %s113, %s114
      %p118 = pneg %p112
      %p119 = scmp.eq.s32.totalorder %s16, 1
      %p120 = por %p118, %p119
      %p121 = scmp.ne.s32.totalorder %s113, %s116
      %p122 = scmp.eq.s32.totalorder %s16, 0
      %p123 = por %p121, %p122
      %p124 = scmp.ne.s32.totalorder %s113, %s116
      %p125 = scmp.eq.s32.totalorder %s21, 1
      %p126 = por %p124, %p125
      %p127 = scmp.ne.s32.totalorder %s116, %s117
      %p128 = scmp.eq.s32.totalorder %s21, 0
      %p129 = por %p127, %p128
      %p130 = scmp.ne.s32.totalorder %s116, %s117
      %p131 = scmp.eq.s32.totalorder %s22, 1
      %p132 = por %p130, %p131
      %p134 = scmp.ne.s32.totalorder %s117, %s133
      %p135 = scmp.eq.s32.totalorder %s22, 0
      %p136 = por %p134, %p135
      %p137 = scmp.le.s32.totalorder 1, %s16
      %p138 = scmp.lt.s32.totalorder %s16, 3
      %p139 = pnand %p137, %p138
      %p140 = pneg %p139
      // Predicated region
      $region9: #{tpu_custom_call.1} parent=5 // pred_check
        _
      $region10: #{tpu_custom_call.1} parent=5 // pred_check_branch
        %142 = sbr.rel (%p139) target = $region12
      $region11: #{tpu_custom_call.1} parent=5 // pred_region
        %s143 = ssub.s32 %s16, 1
        // Predicated region
        $region13: #{tpu_custom_call.1} parent=11 // pred_check
          %p144 = pneg %p82
        $region14: #{tpu_custom_call.1} parent=11 // pred_check_branch
          %146 = sbr.rel (%p144) target = $region16
        $region15: #{tpu_custom_call.1} parent=11 // pred_region
          %s147 = smul.u32 48, %s26
          %s149 = ssub.s32 3072, 3072
          %150 = vsyncadd [#allocation7], %s149
          %s151 = smul.addr %s147, 64
          %s152 = scalar_lea.hbm %s1, %s151
          %s153 = sshll.u32 [#allocation6], 4
          %s154 = int_to_ptr.vmem [resolvable:$true] %s153
          %159 = dma.hbm_to_vmem [thread:$0]  %s152, 3072, %s154, [#allocation7], 64, 64, 4
        $region16: #{tpu_custom_call.1} parent=11 // pred_fallthru
          _
        // Predicated region
        $region17: #{tpu_custom_call.1} parent=11 // pred_check
          %p160 = pneg %p103
        $region18: #{tpu_custom_call.1} parent=11 // pred_check_branch
          %162 = sbr.rel (%p160) target = $region20
        $region19: #{tpu_custom_call.1} parent=11 // pred_region
          %s164 = ssub.s32 2048, 2048
          %165 = vsyncadd [#allocation7], %s164
          %s166 = sshll.u32 [#allocation8], 4
          %s167 = int_to_ptr.vmem [resolvable:$true] %s166
          %172 = dma.hbm_to_vmem [thread:$0]  %s2, 2048, %s167, [#allocation7], 128, 128, 8
        $region20: #{tpu_custom_call.1} parent=11 // pred_fallthru
          _
      $region12: #{tpu_custom_call.1} parent=5 // pred_fallthru
        _
      %p173 = scmp.lt.s32.totalorder %s16, 2
      // Predicated region
      $region21: #{tpu_custom_call.1} parent=5 // pred_check
        %p174 = pneg %p173
      $region22: #{tpu_custom_call.1} parent=5 // pred_check_branch
        %176 = sbr.rel (%p174) target = $region24
      $region23: #{tpu_custom_call.1} parent=5 // pred_region
        // Predicated region
        $region25: #{tpu_custom_call.1} parent=23 // pred_check
          %p177 = pneg %p50
        $region26: #{tpu_custom_call.1} parent=23 // pred_check_branch
          %179 = sbr.rel (%p177) target = $region28
        $region27: #{tpu_custom_call.1} parent=23 // pred_region
          %s180 = sand.u32 %s40, 1
          %s181 = scalar_lea.sflag [#allocation4], %s180
          %s182 = sand.u32 %s40, 1
          %s183 = smul.addr %s182, 240
          %s184 = scalar_lea.vmem [#allocation3], %s183
          %s185 = smul.u32 20, %s23
          %s186 = smul.u32 3, %s24
          %s188 = ssub.s32 3840, 3840
          %189 = vsyncadd %s181, %s188
          %s190 = smul.addr %s185, 3
          %s191 = sadd.s32 %s186, %s190
          %s192 = smul.addr %s191, 64
          %s193 = scalar_lea.hbm %s0, %s192
          %s194 = sshll.u32 %s184, 4
          %s195 = int_to_ptr.vmem [resolvable:$true] %s194
          %200 = dma.hbm_to_vmem [thread:$0]  %s193, 3840, %s195, %s181, 192, 192, 12
        $region28: #{tpu_custom_call.1} parent=23 // pred_fallthru
          _
      $region24: #{tpu_custom_call.1} parent=5 // pred_fallthru
        _
      %p201 = scmp.le.s32.totalorder 1, %s16
      %p202 = scmp.lt.s32.totalorder %s16, 3
      %p203 = pnand %p201, %p202
      %p204 = pneg %p203
      // Predicated region
      $region29: #{tpu_custom_call.1} parent=5 // pred_check
        _
      $region30: #{tpu_custom_call.1} parent=5 // pred_check_branch
        %206 = sbr.rel (%p203) target = $region32
      $region31: #{tpu_custom_call.1} parent=5 // pred_region
        %s207 = ssub.s32 %s16, 1
        %s208 = sand.u32 %s43, 1
        %s209 = scalar_lea.sflag [#allocation4], %s208
        %s210 = sand.u32 %s43, 1
        %s211 = smul.addr %s210, 240
        %s212 = scalar_lea.vmem [#allocation3], %s211
        // Predicated region
        $region33: #{tpu_custom_call.1} parent=31 // pred_check
          %p213 = pneg %p56
        $region34: #{tpu_custom_call.1} parent=31 // pred_check_branch
          %215 = sbr.rel (%p213) target = $region36
        $region35: #{tpu_custom_call.1} parent=31 // pred_region
          %216 = dma.done %s209, 3840
        $region36: #{tpu_custom_call.1} parent=31 // pred_fallthru
          _
        // Predicated region
        $region37: #{tpu_custom_call.1} parent=31 // pred_check
          %p217 = pneg %p82
        $region38: #{tpu_custom_call.1} parent=31 // pred_check_branch
          %219 = sbr.rel (%p217) target = $region40
        $region39: #{tpu_custom_call.1} parent=31 // pred_region
          %220 = dma.done [#allocation7], 3072
        $region40: #{tpu_custom_call.1} parent=31 // pred_fallthru
          _
        // Predicated region
        $region41: #{tpu_custom_call.1} parent=31 // pred_check
          %p221 = pneg %p103
        $region42: #{tpu_custom_call.1} parent=31 // pred_check_branch
          %223 = sbr.rel (%p221) target = $region44
        $region43: #{tpu_custom_call.1} parent=31 // pred_region
          %224 = dma.done [#allocation7], 2048
        $region44: #{tpu_custom_call.1} parent=31 // pred_fallthru
          _
        %s225 = sand.u32 %s43, 1
        %s226 = scalar_lea.sflag [#allocation4], %s225
        %s227 = sand.u32 %s43, 1
        %s228 = smul.addr %s227, 240
        %s229 = scalar_lea.vmem [#allocation3], %s228
        %p230 = pneg %p56
        %p231 = pneg %p53
        %p232 = pneg %p82
        %p233 = pneg %p79
        %p234 = pneg %p103
        %p235 = pneg %p100
        %p236 = pneg %p129
        %p237 = pneg %p126
        %s238 = sand.u32 %s116, 1
        %s239 = scalar_lea.sflag [#allocation5], %s238
        %s240 = sand.u32 %s116, 1
        %s241 = smul.addr %s240, 320
        %s242 = scalar_lea.vmem [#allocation9], %s241
        %s243 = smul.u32 20, %s25
        %s244 = smul.u32 3, %s26
        %s245 = smul.u32 48, %s26
        %s246 = smul.u32 20, %s25
        %p248 = scmp.eq.s32.totalorder %s26, 0
        // Predicated region
        $region45: #{tpu_custom_call.1} parent=31 // pred_check
          %p249 = pneg %p248
        $region46: #{tpu_custom_call.1} parent=31 // pred_check_branch
          %251 = sbr.rel (%p249) target = $region48
        $region47: #{tpu_custom_call.1} parent=31 // pred_region
          %252 = vst [vmem:[#allocation2] sm:$0xff] 0.0
          %253 = vst [vmem:[#allocation2 + $0x8] sm:$0xff] 0.0
          %254 = vst [vmem:[#allocation2 + $0x10] sm:$0xff] 0.0
          %255 = vst [vmem:[#allocation2 + $0x18] sm:$0xff] 0.0
          %256 = vst [vmem:[#allocation2 + $0x20] sm:$0xff] 0.0
          %257 = vst [vmem:[#allocation2 + $0x28] sm:$0xff] 0.0
          %258 = vst [vmem:[#allocation2 + $0x30] sm:$0xff] 0.0
          %259 = vst [vmem:[#allocation2 + $0x38] sm:$0xff] 0.0
          %260 = vst [vmem:[#allocation2 + $0x40] sm:$0xff] 0.0
          %261 = vst [vmem:[#allocation2 + $0x48] sm:$0xff] 0.0
          %262 = vst [vmem:[#allocation2 + $0x50] sm:$0xff] 0.0
          %263 = vst [vmem:[#allocation2 + $0x58] sm:$0xff] 0.0
          %264 = vst [vmem:[#allocation2 + $0x60] sm:$0xff] 0.0
          %265 = vst [vmem:[#allocation2 + $0x68] sm:$0xff] 0.0
          %266 = vst [vmem:[#allocation2 + $0x70] sm:$0xff] 0.0
          %267 = vst [vmem:[#allocation2 + $0x78] sm:$0xff] 0.0
          %268 = vst [vmem:[#allocation2 + $0x80] sm:$0xff] 0.0
          %269 = vst [vmem:[#allocation2 + $0x88] sm:$0xff] 0.0
          %270 = vst [vmem:[#allocation2 + $0x90] sm:$0xff] 0.0
          %271 = vst [vmem:[#allocation2 + $0x98] sm:$0xff] 0.0
        $region48: #{tpu_custom_call.1} parent=31 // pred_fallthru
          _
        %v272 = vld [vmem:[#allocation2] sm:$0xff]
        %v273 = vld [vmem:[#allocation2 + $0x8] sm:$0xff]
        %v274 = vld [vmem:[#allocation2 + $0x10] sm:$0xff]
        %v275 = vld [vmem:[#allocation2 + $0x18] sm:$0xff]
        %v276 = vld [vmem:[#allocation2 + $0x20] sm:$0xff]
        %v277 = vld [vmem:[#allocation2 + $0x28] sm:$0xff]
        %v278 = vld [vmem:[#allocation2 + $0x30] sm:$0xff]
        %v279 = vld [vmem:[#allocation2 + $0x38] sm:$0xff]
        %v280 = vld [vmem:[#allocation2 + $0x40] sm:$0xff]
        %v281 = vld [vmem:[#allocation2 + $0x48] sm:$0xff]
        %v282 = vld [vmem:[#allocation2 + $0x50] sm:$0xff]
        %v283 = vld [vmem:[#allocation2 + $0x58] sm:$0xff]
        %v284 = vld [vmem:[#allocation2 + $0x60] sm:$0xff]
        %v285 = vld [vmem:[#allocation2 + $0x68] sm:$0xff]
        %v286 = vld [vmem:[#allocation2 + $0x70] sm:$0xff]
        %v287 = vld [vmem:[#allocation2 + $0x78] sm:$0xff]
        %v288 = vld [vmem:[#allocation2 + $0x80] sm:$0xff]
        %v289 = vld [vmem:[#allocation2 + $0x88] sm:$0xff]
        %v290 = vld [vmem:[#allocation2 + $0x90] sm:$0xff]
        %v291 = vld [vmem:[#allocation2 + $0x98] sm:$0xff]
        %v292 = vld [vmem:[%s212] sm:$0xff]
        %v293 = vld [vmem:[%s212 + $0x8] sm:$0xf]
        %v294 = vld [vmem:[%s212 + $0xc] sm:$0xff]
        %v295 = vld [vmem:[%s212 + $0x14] sm:$0xf]
        %v296 = vld [vmem:[%s212 + $0x18] sm:$0xff]
        %v297 = vld [vmem:[%s212 + $0x20] sm:$0xf]
        %v298 = vld [vmem:[%s212 + $0x24] sm:$0xff]
        %v299 = vld [vmem:[%s212 + $0x2c] sm:$0xf]
        %v300 = vld [vmem:[%s212 + $0x30] sm:$0xff]
        %v301 = vld [vmem:[%s212 + $0x38] sm:$0xf]
        %v302 = vld [vmem:[%s212 + $0x3c] sm:$0xff]
        %v303 = vld [vmem:[%s212 + $0x44] sm:$0xf]
        %v304 = vld [vmem:[%s212 + $0x48] sm:$0xff]
        %v305 = vld [vmem:[%s212 + $0x50] sm:$0xf]
        %v306 = vld [vmem:[%s212 + $0x54] sm:$0xff]
        %v307 = vld [vmem:[%s212 + $0x5c] sm:$0xf]
        %v308 = vld [vmem:[%s212 + $0x60] sm:$0xff]
        %v309 = vld [vmem:[%s212 + $0x68] sm:$0xf]
        %v310 = vld [vmem:[%s212 + $0x6c] sm:$0xff]
        %v311 = vld [vmem:[%s212 + $0x74] sm:$0xf]
        %v312 = vld [vmem:[%s212 + $0x78] sm:$0xff]
        %v313 = vld [vmem:[%s212 + $0x80] sm:$0xf]
        %v314 = vld [vmem:[%s212 + $0x84] sm:$0xff]
        %v315 = vld [vmem:[%s212 + $0x8c] sm:$0xf]
        %v316 = vld [vmem:[%s212 + $0x90] sm:$0xff]
        %v317 = vld [vmem:[%s212 + $0x98] sm:$0xf]
        %v318 = vld [vmem:[%s212 + $0x9c] sm:$0xff]
        %v319 = vld [vmem:[%s212 + $0xa4] sm:$0xf]
        %v320 = vld [vmem:[%s212 + $0xa8] sm:$0xff]
        %v321 = vld [vmem:[%s212 + $0xb0] sm:$0xf]
        %v322 = vld [vmem:[%s212 + $0xb4] sm:$0xff]
        %v323 = vld [vmem:[%s212 + $0xbc] sm:$0xf]
        %v324 = vld [vmem:[%s212 + $0xc0] sm:$0xff]
        %v325 = vld [vmem:[%s212 + $0xc8] sm:$0xf]
        %v326 = vld [vmem:[%s212 + $0xcc] sm:$0xff]
        %v327 = vld [vmem:[%s212 + $0xd4] sm:$0xf]
        %v328 = vld [vmem:[%s212 + $0xd8] sm:$0xff]
        %v329 = vld [vmem:[%s212 + $0xe0] sm:$0xf]
        %v330 = vld [vmem:[%s212 + $0xe4] sm:$0xff]
        %v331 = vld [vmem:[%s212 + $0xec] sm:$0xf]
        %v332 = vld [vmem:[#allocation6] sm:$0xf]
        %v333 = vld [vmem:[#allocation6 + $0x4] sm:$0xf]
        %v334 = vld [vmem:[#allocation6 + $0x8] sm:$0xf]
        %v335 = vld [vmem:[#allocation6 + $0xc] sm:$0xf]
        %v336 = vld [vmem:[#allocation6 + $0x10] sm:$0xf]
        %v337 = vld [vmem:[#allocation6 + $0x14] sm:$0xf]
        %v338 = vld [vmem:[#allocation6 + $0x18] sm:$0xf]
        %v339 = vld [vmem:[#allocation6 + $0x1c] sm:$0xf]
        %v340 = vld [vmem:[#allocation6 + $0x20] sm:$0xf]
        %v341 = vld [vmem:[#allocation6 + $0x24] sm:$0xf]
        %v342 = vld [vmem:[#allocation6 + $0x28] sm:$0xf]
        %v343 = vld [vmem:[#allocation6 + $0x2c] sm:$0xf]
        %v344 = vld [vmem:[#allocation6 + $0x30] sm:$0xf]
        %v345 = vld [vmem:[#allocation6 + $0x34] sm:$0xf]
        %v346 = vld [vmem:[#allocation6 + $0x38] sm:$0xf]
        %v347 = vld [vmem:[#allocation6 + $0x3c] sm:$0xf]
        %v348 = vld [vmem:[#allocation6 + $0x40] sm:$0xf]
        %v349 = vld [vmem:[#allocation6 + $0x44] sm:$0xf]
        %v350 = vld [vmem:[#allocation6 + $0x48] sm:$0xf]
        %v351 = vld [vmem:[#allocation6 + $0x4c] sm:$0xf]
        %v352 = vld [vmem:[#allocation6 + $0x50] sm:$0xf]
        %v353 = vld [vmem:[#allocation6 + $0x54] sm:$0xf]
        %v354 = vld [vmem:[#allocation6 + $0x58] sm:$0xf]
        %v355 = vld [vmem:[#allocation6 + $0x5c] sm:$0xf]
        %v356 = vld [vmem:[#allocation6 + $0x60] sm:$0xf]
        %v357 = vld [vmem:[#allocation6 + $0x64] sm:$0xf]
        %v358 = vld [vmem:[#allocation6 + $0x68] sm:$0xf]
        %v359 = vld [vmem:[#allocation6 + $0x6c] sm:$0xf]
        %v360 = vld [vmem:[#allocation6 + $0x70] sm:$0xf]
        %v361 = vld [vmem:[#allocation6 + $0x74] sm:$0xf]
        %v362 = vld [vmem:[#allocation6 + $0x78] sm:$0xf]
        %v363 = vld [vmem:[#allocation6 + $0x7c] sm:$0xf]
        %v364 = vld [vmem:[#allocation6 + $0x80] sm:$0xf]
        %v365 = vld [vmem:[#allocation6 + $0x84] sm:$0xf]
        %v366 = vld [vmem:[#allocation6 + $0x88] sm:$0xf]
        %v367 = vld [vmem:[#allocation6 + $0x8c] sm:$0xf]
        %v368 = vld [vmem:[#allocation6 + $0x90] sm:$0xf]
        %v369 = vld [vmem:[#allocation6 + $0x94] sm:$0xf]
        %v370 = vld [vmem:[#allocation6 + $0x98] sm:$0xf]
        %v371 = vld [vmem:[#allocation6 + $0x9c] sm:$0xf]
        %v372 = vld [vmem:[#allocation6 + $0xa0] sm:$0xf]
        %v373 = vld [vmem:[#allocation6 + $0xa4] sm:$0xf]
        %v374 = vld [vmem:[#allocation6 + $0xa8] sm:$0xf]
        %v375 = vld [vmem:[#allocation6 + $0xac] sm:$0xf]
        %v376 = vld [vmem:[#allocation6 + $0xb0] sm:$0xf]
        %v377 = vld [vmem:[#allocation6 + $0xb4] sm:$0xf]
        %v378 = vld [vmem:[#allocation6 + $0xb8] sm:$0xf]
        %v379 = vld [vmem:[#allocation6 + $0xbc] sm:$0xf]
        %v420 = vunpack.c.l.b16 %v292
        %v421 = vunpack.c.h.b16 %v292
        %v422 = vunpack.c.l.b16 %v293
        %v423 = vunpack.c.l.b16 %v294
        %v424 = vunpack.c.h.b16 %v294
        %v425 = vunpack.c.l.b16 %v295
        %v426 = vunpack.c.l.b16 %v296
        %v427 = vunpack.c.h.b16 %v296
        %v428 = vunpack.c.l.b16 %v297
        %v429 = vunpack.c.l.b16 %v298
        %v430 = vunpack.c.h.b16 %v298
        %v431 = vunpack.c.l.b16 %v299
        %v432 = vunpack.c.l.b16 %v300
        %v433 = vunpack.c.h.b16 %v300
        %v434 = vunpack.c.l.b16 %v301
        %v435 = vunpack.c.l.b16 %v302
        %v436 = vunpack.c.h.b16 %v302
        %v437 = vunpack.c.l.b16 %v303
        %v438 = vunpack.c.l.b16 %v304
        %v439 = vunpack.c.h.b16 %v304
        %v440 = vunpack.c.l.b16 %v305
        %v441 = vunpack.c.l.b16 %v306
        %v442 = vunpack.c.h.b16 %v306
        %v443 = vunpack.c.l.b16 %v307
        %v444 = vunpack.c.l.b16 %v308
        %v445 = vunpack.c.h.b16 %v308
        %v446 = vunpack.c.l.b16 %v309
        %v447 = vunpack.c.l.b16 %v310
        %v448 = vunpack.c.h.b16 %v310
        %v449 = vunpack.c.l.b16 %v311
        %v450 = vunpack.c.l.b16 %v312
        %v451 = vunpack.c.h.b16 %v312
        %v452 = vunpack.c.l.b16 %v313
        %v453 = vunpack.c.l.b16 %v314
        %v454 = vunpack.c.h.b16 %v314
        %v455 = vunpack.c.l.b16 %v315
        %v456 = vunpack.c.l.b16 %v316
        %v457 = vunpack.c.h.b16 %v316
        %v458 = vunpack.c.l.b16 %v317
        %v459 = vunpack.c.l.b16 %v318
        %v460 = vunpack.c.h.b16 %v318
        %v461 = vunpack.c.l.b16 %v319
        %v462 = vunpack.c.l.b16 %v320
        %v463 = vunpack.c.h.b16 %v320
        %v464 = vunpack.c.l.b16 %v321
        %v465 = vunpack.c.l.b16 %v322
        %v466 = vunpack.c.h.b16 %v322
        %v467 = vunpack.c.l.b16 %v323
        %v468 = vunpack.c.l.b16 %v324
        %v469 = vunpack.c.h.b16 %v324
        %v470 = vunpack.c.l.b16 %v325
        %v471 = vunpack.c.l.b16 %v326
        %v472 = vunpack.c.h.b16 %v326
        %v473 = vunpack.c.l.b16 %v327
        %v474 = vunpack.c.l.b16 %v328
        %v475 = vunpack.c.h.b16 %v328
        %v476 = vunpack.c.l.b16 %v329
        %v477 = vunpack.c.l.b16 %v330
        %v478 = vunpack.c.h.b16 %v330
        %v479 = vunpack.c.l.b16 %v331
        %v480 = vpack.c.b16 %v423, %v420
        %v481 = vpack.c.b16 %v424, %v421
        %v482 = vpack.c.b16 %v425, %v422
        %v483 = vpack.c.b16 %v429, %v426
        %v484 = vpack.c.b16 %v430, %v427
        %v485 = vpack.c.b16 %v431, %v428
        %v486 = vpack.c.b16 %v435, %v432
        %v487 = vpack.c.b16 %v436, %v433
        %v488 = vpack.c.b16 %v437, %v434
        %v489 = vpack.c.b16 %v441, %v438
        %v490 = vpack.c.b16 %v442, %v439
        %v491 = vpack.c.b16 %v443, %v440
        %v492 = vpack.c.b16 %v447, %v444
        %v493 = vpack.c.b16 %v448, %v445
        %v494 = vpack.c.b16 %v449, %v446
        %v495 = vpack.c.b16 %v453, %v450
        %v496 = vpack.c.b16 %v454, %v451
        %v497 = vpack.c.b16 %v455, %v452
        %v498 = vpack.c.b16 %v459, %v456
        %v499 = vpack.c.b16 %v460, %v457
        %v500 = vpack.c.b16 %v461, %v458
        %v501 = vpack.c.b16 %v465, %v462
        %v502 = vpack.c.b16 %v466, %v463
        %v503 = vpack.c.b16 %v467, %v464
        %v504 = vpack.c.b16 %v471, %v468
        %v505 = vpack.c.b16 %v472, %v469
        %v506 = vpack.c.b16 %v473, %v470
        %v507 = vpack.c.b16 %v477, %v474
        %v508 = vpack.c.b16 %v478, %v475
        %v509 = vpack.c.b16 %v479, %v476
        %v588 = vunpack.c.l.b16 %v332
        %v589 = vunpack.c.l.b16 %v333
        %v590 = vunpack.c.l.b16 %v334
        %v591 = vunpack.c.l.b16 %v335
        %v592 = vunpack.c.l.b16 %v336
        %v593 = vunpack.c.l.b16 %v337
        %v594 = vunpack.c.l.b16 %v338
        %v595 = vunpack.c.l.b16 %v339
        %v596 = vunpack.c.l.b16 %v340
        %v597 = vunpack.c.l.b16 %v341
        %v598 = vunpack.c.l.b16 %v342
        %v599 = vunpack.c.l.b16 %v343
        %v600 = vunpack.c.l.b16 %v344
        %v601 = vunpack.c.l.b16 %v345
        %v602 = vunpack.c.l.b16 %v346
        %v603 = vunpack.c.l.b16 %v347
        %v604 = vunpack.c.l.b16 %v348
        %v605 = vunpack.c.l.b16 %v349
        %v606 = vunpack.c.l.b16 %v350
        %v607 = vunpack.c.l.b16 %v351
        %v608 = vunpack.c.l.b16 %v352
        %v609 = vunpack.c.l.b16 %v353
        %v610 = vunpack.c.l.b16 %v354
        %v611 = vunpack.c.l.b16 %v355
        %v612 = vunpack.c.l.b16 %v356
        %v613 = vunpack.c.l.b16 %v357
        %v614 = vunpack.c.l.b16 %v358
        %v615 = vunpack.c.l.b16 %v359
        %v616 = vunpack.c.l.b16 %v360
        %v617 = vunpack.c.l.b16 %v361
        %v618 = vunpack.c.l.b16 %v362
        %v619 = vunpack.c.l.b16 %v363
        %v620 = vunpack.c.l.b16 %v364
        %v621 = vunpack.c.l.b16 %v365
        %v622 = vunpack.c.l.b16 %v366
        %v623 = vunpack.c.l.b16 %v367
        %v624 = vunpack.c.l.b16 %v368
        %v625 = vunpack.c.l.b16 %v369
        %v626 = vunpack.c.l.b16 %v370
        %v627 = vunpack.c.l.b16 %v371
        %v628 = vunpack.c.l.b16 %v372
        %v629 = vunpack.c.l.b16 %v373
        %v630 = vunpack.c.l.b16 %v374
        %v631 = vunpack.c.l.b16 %v375
        %v632 = vunpack.c.l.b16 %v376
        %v633 = vunpack.c.l.b16 %v377
        %v634 = vunpack.c.l.b16 %v378
        %v635 = vunpack.c.l.b16 %v379
        %v636 = vpack.c.b16 %v589, %v588
        %v637 = vpack.c.b16 %v591, %v590
        %v638 = vpack.c.b16 %v593, %v592
        %v639 = vpack.c.b16 %v595, %v594
        %v640 = vpack.c.b16 %v597, %v596
        %v641 = vpack.c.b16 %v599, %v598
        %v642 = vpack.c.b16 %v601, %v600
        %v643 = vpack.c.b16 %v603, %v602
        %v644 = vpack.c.b16 %v605, %v604
        %v645 = vpack.c.b16 %v607, %v606
        %v646 = vpack.c.b16 %v609, %v608
        %v647 = vpack.c.b16 %v611, %v610
        %v648 = vpack.c.b16 %v613, %v612
        %v649 = vpack.c.b16 %v615, %v614
        %v650 = vpack.c.b16 %v617, %v616
        %v651 = vpack.c.b16 %v619, %v618
        %v652 = vpack.c.b16 %v621, %v620
        %v653 = vpack.c.b16 %v623, %v622
        %v654 = vpack.c.b16 %v625, %v624
        %v655 = vpack.c.b16 %v627, %v626
        %v656 = vpack.c.b16 %v629, %v628
        %v657 = vpack.c.b16 %v631, %v630
        %v658 = vpack.c.b16 %v633, %v632
        %v659 = vpack.c.b16 %v635, %v634
        %684 = vmatprep.subr.bf16.mxu0 0
        %685 = vmatpush1.bf16.msra.mxu0 %v643
        %686 = vmatprep.subr.bf16.mxu0 0
        %687 = vmatpush1.bf16.msra.mxu0 %v642
        %688 = vmatprep.subr.bf16.mxu0 0
        %689 = vmatpush1.bf16.msra.mxu0 %v641
        %690 = vmatprep.subr.bf16.mxu0 0
        %691 = vmatpush1.bf16.msra.mxu0 %v640
        %692 = vmatprep.subr.bf16.mxu0 0
        %693 = vmatpush1.bf16.msra.mxu0 %v639
        %694 = vmatprep.subr.bf16.mxu0 0
        %695 = vmatpush1.bf16.msra.mxu0 %v638
        %696 = vmatprep.subr.bf16.mxu0 0
        %697 = vmatpush1.bf16.msra.mxu0 %v637
        %698 = vmatprep.subr.bf16.mxu0 0
        %699 = vmatpush1.bf16.msra.mxu0 %v636
        %700 = vmatprep.subr.bf16.mxu0 0
        %701 = vmatpush2.bf16.msra.mxu0 %v651
        %702 = vmatprep.subr.bf16.mxu0 0
        %703 = vmatpush2.bf16.msra.mxu0 %v650
        %704 = vmatprep.subr.bf16.mxu0 0
        %705 = vmatpush2.bf16.msra.mxu0 %v649
        %706 = vmatprep.subr.bf16.mxu0 0
        %707 = vmatpush2.bf16.msra.mxu0 %v648
        %708 = vmatprep.subr.bf16.mxu0 0
        %709 = vmatpush2.bf16.msra.mxu0 %v647
        %710 = vmatprep.subr.bf16.mxu0 0
        %711 = vmatpush2.bf16.msra.mxu0 %v646
        %712 = vmatprep.subr.bf16.mxu0 0
        %713 = vmatpush2.bf16.msra.mxu0 %v645
        %714 = vmatprep.subr.bf16.mxu0 0
        %715 = vmatpush2.bf16.msra.mxu0 %v644
        %716 = vmatprep.mubr.bf16.mxu0 %v481
        %717 = vmatmul.mubr.bf16.gmra.mxu0 %v480
        %v718 = vpop.f32.mrf.mxu0
        %v719 = vadd.f32 0.0, %v718
        %v720 = vpop.f32.mrf.mxu0
        %v721 = vpop.f32.mrf.mxu0
        %v722 = vadd.f32 0.0, %v721
        %v723 = vpop.f32.mrf.mxu0
        %724 = vmatprep.mubr.bf16.mxu0 %v484
        %725 = vmatmul.mubr.bf16.gmra.mxu0 %v483
        %v726 = vpop.f32.mrf.mxu0
        %v727 = vadd.f32 0.0, %v726
        %v728 = vpop.f32.mrf.mxu0
        %v729 = vpop.f32.mrf.mxu0
        %v730 = vadd.f32 0.0, %v729
        %v731 = vpop.f32.mrf.mxu0
        %732 = vmatprep.mubr.bf16.mxu0 %v487
        %733 = vmatmul.mubr.bf16.gmra.mxu0 %v486
        %v734 = vpop.f32.mrf.mxu0
        %v735 = vadd.f32 0.0, %v734
        %v736 = vpop.f32.mrf.mxu0
        %v737 = vpop.f32.mrf.mxu0
        %v738 = vadd.f32 0.0, %v737
        %v739 = vpop.f32.mrf.mxu0
        %740 = vmatprep.mubr.bf16.mxu0 %v490
        %741 = vmatmul.mubr.bf16.gmra.mxu0 %v489
        %v742 = vpop.f32.mrf.mxu0
        %v743 = vadd.f32 0.0, %v742
        %v744 = vpop.f32.mrf.mxu0
        %v745 = vpop.f32.mrf.mxu0
        %v746 = vadd.f32 0.0, %v745
        %v747 = vpop.f32.mrf.mxu0
        %748 = vmatprep.mubr.bf16.mxu0 %v493
        %749 = vmatmul.mubr.bf16.gmra.mxu0 %v492
        %v750 = vpop.f32.mrf.mxu0
        %v751 = vadd.f32 0.0, %v750
        %v752 = vpop.f32.mrf.mxu0
        %v753 = vpop.f32.mrf.mxu0
        %v754 = vadd.f32 0.0, %v753
        %v755 = vpop.f32.mrf.mxu0
        %756 = vmatprep.mubr.bf16.mxu0 %v496
        %757 = vmatmul.mubr.bf16.gmra.mxu0 %v495
        %v758 = vpop.f32.mrf.mxu0
        %v759 = vadd.f32 0.0, %v758
        %v760 = vpop.f32.mrf.mxu0
        %v761 = vpop.f32.mrf.mxu0
        %v762 = vadd.f32 0.0, %v761
        %v763 = vpop.f32.mrf.mxu0
        %764 = vmatprep.mubr.bf16.mxu0 %v499
        %765 = vmatmul.mubr.bf16.gmra.mxu0 %v498
        %v766 = vpop.f32.mrf.mxu0
        %v767 = vadd.f32 0.0, %v766
        %v768 = vpop.f32.mrf.mxu0
        %v769 = vpop.f32.mrf.mxu0
        %v770 = vadd.f32 0.0, %v769
        %v771 = vpop.f32.mrf.mxu0
        %772 = vmatprep.mubr.bf16.mxu0 %v502
        %773 = vmatmul.mubr.bf16.gmra.mxu0 %v501
        %v774 = vpop.f32.mrf.mxu0
        %v775 = vadd.f32 0.0, %v774
        %v776 = vpop.f32.mrf.mxu0
        %v777 = vpop.f32.mrf.mxu0
        %v778 = vadd.f32 0.0, %v777
        %v779 = vpop.f32.mrf.mxu0
        %780 = vmatprep.mubr.bf16.mxu0 %v505
        %781 = vmatmul.mubr.bf16.gmra.mxu0 %v504
        %v782 = vpop.f32.mrf.mxu0
        %v783 = vadd.f32 0.0, %v782
        %v784 = vpop.f32.mrf.mxu0
        %v785 = vpop.f32.mrf.mxu0
        %v786 = vadd.f32 0.0, %v785
        %v787 = vpop.f32.mrf.mxu0
        %788 = vmatprep.mubr.bf16.mxu0 %v508
        %789 = vmatmul.mubr.bf16.gmra.mxu0 %v507
        %v790 = vpop.f32.mrf.mxu0
        %v791 = vadd.f32 0.0, %v790
        %v792 = vpop.f32.mrf.mxu0
        %v793 = vpop.f32.mrf.mxu0
        %v794 = vadd.f32 0.0, %v793
        %v795 = vpop.f32.mrf.mxu0
        %796 = vdwg.mxu0
        %797 = vmatprep.subr.bf16.mxu0 0
        %798 = vmatpush1.bf16.msra.mxu0 %v659
        %799 = vmatprep.subr.bf16.mxu0 0
        %800 = vmatpush1.bf16.msra.mxu0 %v658
        %801 = vmatprep.subr.bf16.mxu0 0
        %802 = vmatpush1.bf16.msra.mxu0 %v657
        %803 = vmatprep.subr.bf16.mxu0 0
        %804 = vmatpush1.bf16.msra.mxu0 %v656
        %805 = vmatprep.subr.bf16.mxu0 0
        %806 = vmatpush1.bf16.msra.mxu0 %v655
        %807 = vmatprep.subr.bf16.mxu0 0
        %808 = vmatpush1.bf16.msra.mxu0 %v654
        %809 = vmatprep.subr.bf16.mxu0 0
        %810 = vmatpush1.bf16.msra.mxu0 %v653
        %811 = vmatprep.subr.bf16.mxu0 0
        %812 = vmatpush1.bf16.msra.mxu0 %v652
        %813 = vmatprep.subr.bf16.mxu0 0
        %814 = vmatpush2.bf16.msra.mxu0 0
        %815 = vmatprep.subr.bf16.mxu0 0
        %816 = vmatpush2.bf16.msra.mxu0 0
        %817 = vmatprep.subr.bf16.mxu0 0
        %818 = vmatpush2.bf16.msra.mxu0 0
        %819 = vmatprep.subr.bf16.mxu0 0
        %820 = vmatpush2.bf16.msra.mxu0 0
        %821 = vmatprep.subr.bf16.mxu0 0
        %822 = vmatpush2.bf16.msra.mxu0 0
        %823 = vmatprep.subr.bf16.mxu0 0
        %824 = vmatpush2.bf16.msra.mxu0 0
        %825 = vmatprep.subr.bf16.mxu0 0
        %826 = vmatpush2.bf16.msra.mxu0 0
        %827 = vmatprep.subr.bf16.mxu0 0
        %828 = vmatpush2.bf16.msra.mxu0 0
        %829 = vmatprep.mubr.bf16.mxu0 0
        %830 = vmatmul.mubr.bf16.gmra.mxu0 %v482
        %v831 = vpop.f32.mrf.mxu0
        %v832 = vadd.f32 %v719, %v831
        %v833 = vpop.f32.mrf.mxu0
        %v834 = vpop.f32.mrf.mxu0
        %v835 = vadd.f32 %v722, %v834
        %v836 = vpop.f32.mrf.mxu0
        %837 = vmatprep.mubr.bf16.mxu0 0
        %838 = vmatmul.mubr.bf16.gmra.mxu0 %v485
        %v839 = vpop.f32.mrf.mxu0
        %v840 = vadd.f32 %v727, %v839
        %v841 = vpop.f32.mrf.mxu0
        %v842 = vpop.f32.mrf.mxu0
        %v843 = vadd.f32 %v730, %v842
        %v844 = vpop.f32.mrf.mxu0
        %845 = vmatprep.mubr.bf16.mxu0 0
        %846 = vmatmul.mubr.bf16.gmra.mxu0 %v488
        %v847 = vpop.f32.mrf.mxu0
        %v848 = vadd.f32 %v735, %v847
        %v849 = vpop.f32.mrf.mxu0
        %v850 = vpop.f32.mrf.mxu0
        %v851 = vadd.f32 %v738, %v850
        %v852 = vpop.f32.mrf.mxu0
        %853 = vmatprep.mubr.bf16.mxu0 0
        %854 = vmatmul.mubr.bf16.gmra.mxu0 %v491
        %v855 = vpop.f32.mrf.mxu0
        %v856 = vadd.f32 %v743, %v855
        %v857 = vpop.f32.mrf.mxu0
        %v858 = vpop.f32.mrf.mxu0
        %v859 = vadd.f32 %v746, %v858
        %v860 = vpop.f32.mrf.mxu0
        %861 = vmatprep.mubr.bf16.mxu0 0
        %862 = vmatmul.mubr.bf16.gmra.mxu0 %v494
        %v863 = vpop.f32.mrf.mxu0
        %v864 = vadd.f32 %v751, %v863
        %v865 = vpop.f32.mrf.mxu0
        %v866 = vpop.f32.mrf.mxu0
        %v867 = vadd.f32 %v754, %v866
        %v868 = vpop.f32.mrf.mxu0
        %869 = vmatprep.mubr.bf16.mxu0 0
        %870 = vmatmul.mubr.bf16.gmra.mxu0 %v497
        %v871 = vpop.f32.mrf.mxu0
        %v872 = vadd.f32 %v759, %v871
        %v873 = vpop.f32.mrf.mxu0
        %v874 = vpop.f32.mrf.mxu0
        %v875 = vadd.f32 %v762, %v874
        %v876 = vpop.f32.mrf.mxu0
        %877 = vmatprep.mubr.bf16.mxu0 0
        %878 = vmatmul.mubr.bf16.gmra.mxu0 %v500
        %v879 = vpop.f32.mrf.mxu0
        %v880 = vadd.f32 %v767, %v879
        %v881 = vpop.f32.mrf.mxu0
        %v882 = vpop.f32.mrf.mxu0
        %v883 = vadd.f32 %v770, %v882
        %v884 = vpop.f32.mrf.mxu0
        %885 = vmatprep.mubr.bf16.mxu0 0
        %886 = vmatmul.mubr.bf16.gmra.mxu0 %v503
        %v887 = vpop.f32.mrf.mxu0
        %v888 = vadd.f32 %v775, %v887
        %v889 = vpop.f32.mrf.mxu0
        %v890 = vpop.f32.mrf.mxu0
        %v891 = vadd.f32 %v778, %v890
        %v892 = vpop.f32.mrf.mxu0
        %893 = vmatprep.mubr.bf16.mxu0 0
        %894 = vmatmul.mubr.bf16.gmra.mxu0 %v506
        %v895 = vpop.f32.mrf.mxu0
        %v896 = vadd.f32 %v783, %v895
        %v897 = vpop.f32.mrf.mxu0
        %v898 = vpop.f32.mrf.mxu0
        %v899 = vadd.f32 %v786, %v898
        %v900 = vpop.f32.mrf.mxu0
        %901 = vmatprep.mubr.bf16.mxu0 0
        %902 = vmatmul.mubr.bf16.gmra.mxu0 %v509
        %v903 = vpop.f32.mrf.mxu0
        %v904 = vadd.f32 %v791, %v903
        %v905 = vpop.f32.mrf.mxu0
        %v906 = vpop.f32.mrf.mxu0
        %v907 = vadd.f32 %v794, %v906
        %v908 = vpop.f32.mrf.mxu0
        %909 = vdwg.mxu0
        %v910 = vadd.f32 %v272, %v832
        %v911 = vadd.f32 %v273, %v835
        %v912 = vadd.f32 %v274, %v840
        %v913 = vadd.f32 %v275, %v843
        %v914 = vadd.f32 %v276, %v848
        %v915 = vadd.f32 %v277, %v851
        %v916 = vadd.f32 %v278, %v856
        %v917 = vadd.f32 %v279, %v859
        %v918 = vadd.f32 %v280, %v864
        %v919 = vadd.f32 %v281, %v867
        %v920 = vadd.f32 %v282, %v872
        %v921 = vadd.f32 %v283, %v875
        %v922 = vadd.f32 %v284, %v880
        %v923 = vadd.f32 %v285, %v883
        %v924 = vadd.f32 %v286, %v888
        %v925 = vadd.f32 %v287, %v891
        %v926 = vadd.f32 %v288, %v896
        %v927 = vadd.f32 %v289, %v899
        %v928 = vadd.f32 %v290, %v904
        %v929 = vadd.f32 %v291, %v907
        %930 = vst [vmem:[#allocation2] sm:$0xff] %v910
        %931 = vst [vmem:[#allocation2 + $0x8] sm:$0xff] %v911
        %932 = vst [vmem:[#allocation2 + $0x10] sm:$0xff] %v912
        %933 = vst [vmem:[#allocation2 + $0x18] sm:$0xff] %v913
        %934 = vst [vmem:[#allocation2 + $0x20] sm:$0xff] %v914
        %935 = vst [vmem:[#allocation2 + $0x28] sm:$0xff] %v915
        %936 = vst [vmem:[#allocation2 + $0x30] sm:$0xff] %v916
        %937 = vst [vmem:[#allocation2 + $0x38] sm:$0xff] %v917
        %938 = vst [vmem:[#allocation2 + $0x40] sm:$0xff] %v918
        %939 = vst [vmem:[#allocation2 + $0x48] sm:$0xff] %v919
        %940 = vst [vmem:[#allocation2 + $0x50] sm:$0xff] %v920
        %941 = vst [vmem:[#allocation2 + $0x58] sm:$0xff] %v921
        %942 = vst [vmem:[#allocation2 + $0x60] sm:$0xff] %v922
        %943 = vst [vmem:[#allocation2 + $0x68] sm:$0xff] %v923
        %944 = vst [vmem:[#allocation2 + $0x70] sm:$0xff] %v924
        %945 = vst [vmem:[#allocation2 + $0x78] sm:$0xff] %v925
        %946 = vst [vmem:[#allocation2 + $0x80] sm:$0xff] %v926
        %947 = vst [vmem:[#allocation2 + $0x88] sm:$0xff] %v927
        %948 = vst [vmem:[#allocation2 + $0x90] sm:$0xff] %v928
        %949 = vst [vmem:[#allocation2 + $0x98] sm:$0xff] %v929
        // Predicated region
        $region49: #{tpu_custom_call.1} parent=31 // pred_check
          %p950 = pneg %p248
        $region50: #{tpu_custom_call.1} parent=31 // pred_check_branch
          %952 = sbr.rel (%p950) target = $region52
        $region51: #{tpu_custom_call.1} parent=31 // pred_region
          %v953 = vld [vmem:[#allocation2] sm:$0xff]
          %v954 = vld [vmem:[#allocation2 + $0x8] sm:$0xff]
          %v955 = vld [vmem:[#allocation2 + $0x10] sm:$0xff]
          %v956 = vld [vmem:[#allocation2 + $0x18] sm:$0xff]
          %v957 = vld [vmem:[#allocation2 + $0x20] sm:$0xff]
          %v958 = vld [vmem:[#allocation2 + $0x28] sm:$0xff]
          %v959 = vld [vmem:[#allocation2 + $0x30] sm:$0xff]
          %v960 = vld [vmem:[#allocation2 + $0x38] sm:$0xff]
          %v961 = vld [vmem:[#allocation2 + $0x40] sm:$0xff]
          %v962 = vld [vmem:[#allocation2 + $0x48] sm:$0xff]
          %v963 = vld [vmem:[#allocation2 + $0x50] sm:$0xff]
          %v964 = vld [vmem:[#allocation2 + $0x58] sm:$0xff]
          %v965 = vld [vmem:[#allocation2 + $0x60] sm:$0xff]
          %v966 = vld [vmem:[#allocation2 + $0x68] sm:$0xff]
          %v967 = vld [vmem:[#allocation2 + $0x70] sm:$0xff]
          %v968 = vld [vmem:[#allocation2 + $0x78] sm:$0xff]
          %v969 = vld [vmem:[#allocation2 + $0x80] sm:$0xff]
          %v970 = vld [vmem:[#allocation2 + $0x88] sm:$0xff]
          %v971 = vld [vmem:[#allocation2 + $0x90] sm:$0xff]
          %v972 = vld [vmem:[#allocation2 + $0x98] sm:$0xff]
          %v973 = vpack.c.bf16 %v954, %v953
          %v974 = vpack.c.bf16 %v956, %v955
          %v975 = vpack.c.bf16 %v958, %v957
          %v976 = vpack.c.bf16 %v960, %v959
          %v977 = vpack.c.bf16 %v962, %v961
          %v978 = vpack.c.bf16 %v964, %v963
          %v979 = vpack.c.bf16 %v966, %v965
          %v980 = vpack.c.bf16 %v968, %v967
          %v981 = vpack.c.bf16 %v970, %v969
          %v982 = vpack.c.bf16 %v972, %v971
          %v983 = vld [vmem:[#allocation8] sm:$0xff]
          %v984 = vld [vmem:[#allocation8 + $0x8] sm:$0xff]
          %v985 = vld [vmem:[#allocation8 + $0x10] sm:$0xff]
          %v986 = vld [vmem:[#allocation8 + $0x18] sm:$0xff]
          %v987 = vld [vmem:[#allocation8 + $0x20] sm:$0xff]
          %v988 = vld [vmem:[#allocation8 + $0x28] sm:$0xff]
          %v989 = vld [vmem:[#allocation8 + $0x30] sm:$0xff]
          %v990 = vld [vmem:[#allocation8 + $0x38] sm:$0xff]
          %v991 = vld [vmem:[#allocation8 + $0x40] sm:$0xff]
          %v992 = vld [vmem:[#allocation8 + $0x48] sm:$0xff]
          %v993 = vld [vmem:[#allocation8 + $0x50] sm:$0xff]
          %v994 = vld [vmem:[#allocation8 + $0x58] sm:$0xff]
          %v995 = vld [vmem:[#allocation8 + $0x60] sm:$0xff]
          %v996 = vld [vmem:[#allocation8 + $0x68] sm:$0xff]
          %v997 = vld [vmem:[#allocation8 + $0x70] sm:$0xff]
          %v998 = vld [vmem:[#allocation8 + $0x78] sm:$0xff]
          %v1015 = vunpack.c.l.b16 %v983
          %v1016 = vunpack.c.h.b16 %v983
          %v1017 = vunpack.c.l.b16 %v984
          %v1018 = vunpack.c.h.b16 %v984
          %v1019 = vunpack.c.l.b16 %v985
          %v1020 = vunpack.c.h.b16 %v985
          %v1021 = vunpack.c.l.b16 %v986
          %v1022 = vunpack.c.h.b16 %v986
          %v1023 = vunpack.c.l.b16 %v987
          %v1024 = vunpack.c.h.b16 %v987
          %v1025 = vunpack.c.l.b16 %v988
          %v1026 = vunpack.c.h.b16 %v988
          %v1027 = vunpack.c.l.b16 %v989
          %v1028 = vunpack.c.h.b16 %v989
          %v1029 = vunpack.c.l.b16 %v990
          %v1030 = vunpack.c.h.b16 %v990
          %v1031 = vunpack.c.l.b16 %v991
          %v1032 = vunpack.c.h.b16 %v991
          %v1033 = vunpack.c.l.b16 %v992
          %v1034 = vunpack.c.h.b16 %v992
          %v1035 = vunpack.c.l.b16 %v993
          %v1036 = vunpack.c.h.b16 %v993
          %v1037 = vunpack.c.l.b16 %v994
          %v1038 = vunpack.c.h.b16 %v994
          %v1039 = vunpack.c.l.b16 %v995
          %v1040 = vunpack.c.h.b16 %v995
          %v1041 = vunpack.c.l.b16 %v996
          %v1042 = vunpack.c.h.b16 %v996
          %v1043 = vunpack.c.l.b16 %v997
          %v1044 = vunpack.c.h.b16 %v997
          %v1045 = vunpack.c.l.b16 %v998
          %v1046 = vunpack.c.h.b16 %v998
          %v1047 = vpack.c.b16 %v1017, %v1015
          %v1048 = vpack.c.b16 %v1018, %v1016
          %v1049 = vpack.c.b16 %v1021, %v1019
          %v1050 = vpack.c.b16 %v1022, %v1020
          %v1051 = vpack.c.b16 %v1025, %v1023
          %v1052 = vpack.c.b16 %v1026, %v1024
          %v1053 = vpack.c.b16 %v1029, %v1027
          %v1054 = vpack.c.b16 %v1030, %v1028
          %v1055 = vpack.c.b16 %v1033, %v1031
          %v1056 = vpack.c.b16 %v1034, %v1032
          %v1057 = vpack.c.b16 %v1037, %v1035
          %v1058 = vpack.c.b16 %v1038, %v1036
          %v1059 = vpack.c.b16 %v1041, %v1039
          %v1060 = vpack.c.b16 %v1042, %v1040
          %v1061 = vpack.c.b16 %v1045, %v1043
          %v1062 = vpack.c.b16 %v1046, %v1044
          %1079 = vmatprep.subr.bf16.mxu0 %v1062
          %1080 = vmatpush1.bf16.msra.mxu0 %v1061
          %1081 = vmatprep.subr.bf16.mxu0 %v1060
          %1082 = vmatpush1.bf16.msra.mxu0 %v1059
          %1083 = vmatprep.subr.bf16.mxu0 %v1058
          %1084 = vmatpush1.bf16.msra.mxu0 %v1057
          %1085 = vmatprep.subr.bf16.mxu0 %v1056
          %1086 = vmatpush1.bf16.msra.mxu0 %v1055
          %1087 = vmatprep.subr.bf16.mxu0 %v1054
          %1088 = vmatpush1.bf16.msra.mxu0 %v1053
          %1089 = vmatprep.subr.bf16.mxu0 %v1052
          %1090 = vmatpush1.bf16.msra.mxu0 %v1051
          %1091 = vmatprep.subr.bf16.mxu0 %v1050
          %1092 = vmatpush1.bf16.msra.mxu0 %v1049
          %1093 = vmatprep.subr.bf16.mxu0 %v1048
          %1094 = vmatpush1.bf16.msra.mxu0 %v1047
          %1095 = vmatprep.subr.bf16.mxu0 0
          %1096 = vmatpush2.bf16.msra.mxu0 0
          %1097 = vmatprep.subr.bf16.mxu0 0
          %1098 = vmatpush2.bf16.msra.mxu0 0
          %1099 = vmatprep.subr.bf16.mxu0 0
          %1100 = vmatpush2.bf16.msra.mxu0 0
          %1101 = vmatprep.subr.bf16.mxu0 0
          %1102 = vmatpush2.bf16.msra.mxu0 0
          %1103 = vmatprep.subr.bf16.mxu0 0
          %1104 = vmatpush2.bf16.msra.mxu0 0
          %1105 = vmatprep.subr.bf16.mxu0 0
          %1106 = vmatpush2.bf16.msra.mxu0 0
          %1107 = vmatprep.subr.bf16.mxu0 0
          %1108 = vmatpush2.bf16.msra.mxu0 0
          %1109 = vmatprep.subr.bf16.mxu0 0
          %1110 = vmatpush2.bf16.msra.mxu0 0
          %1111 = vmatprep.mubr.bf16.mxu0 0
          %1112 = vmatmul.mubr.bf16.gmra.mxu0 %v973
          %v1113 = vpop.f32.mrf.mxu0
          %v1114 = vadd.f32 0.0, %v1113
          %v1115 = vpop.f32.mrf.mxu0
          %v1116 = vadd.f32 0.0, %v1115
          %v1117 = vpop.f32.mrf.mxu0
          %v1118 = vadd.f32 0.0, %v1117
          %v1119 = vpop.f32.mrf.mxu0
          %v1120 = vadd.f32 0.0, %v1119
          %1121 = vmatprep.mubr.bf16.mxu0 0
          %1122 = vmatmul.mubr.bf16.gmra.mxu0 %v974
          %v1123 = vpop.f32.mrf.mxu0
          %v1124 = vadd.f32 0.0, %v1123
          %v1125 = vpop.f32.mrf.mxu0
          %v1126 = vadd.f32 0.0, %v1125
          %v1127 = vpop.f32.mrf.mxu0
          %v1128 = vadd.f32 0.0, %v1127
          %v1129 = vpop.f32.mrf.mxu0
          %v1130 = vadd.f32 0.0, %v1129
          %1131 = vmatprep.mubr.bf16.mxu0 0
          %1132 = vmatmul.mubr.bf16.gmra.mxu0 %v975
          %v1133 = vpop.f32.mrf.mxu0
          %v1134 = vadd.f32 0.0, %v1133
          %v1135 = vpop.f32.mrf.mxu0
          %v1136 = vadd.f32 0.0, %v1135
          %v1137 = vpop.f32.mrf.mxu0
          %v1138 = vadd.f32 0.0, %v1137
          %v1139 = vpop.f32.mrf.mxu0
          %v1140 = vadd.f32 0.0, %v1139
          %1141 = vmatprep.mubr.bf16.mxu0 0
          %1142 = vmatmul.mubr.bf16.gmra.mxu0 %v976
          %v1143 = vpop.f32.mrf.mxu0
          %v1144 = vadd.f32 0.0, %v1143
          %v1145 = vpop.f32.mrf.mxu0
          %v1146 = vadd.f32 0.0, %v1145
          %v1147 = vpop.f32.mrf.mxu0
          %v1148 = vadd.f32 0.0, %v1147
          %v1149 = vpop.f32.mrf.mxu0
          %v1150 = vadd.f32 0.0, %v1149
          %1151 = vmatprep.mubr.bf16.mxu0 0
          %1152 = vmatmul.mubr.bf16.gmra.mxu0 %v977
          %v1153 = vpop.f32.mrf.mxu0
          %v1154 = vadd.f32 0.0, %v1153
          %v1155 = vpop.f32.mrf.mxu0
          %v1156 = vadd.f32 0.0, %v1155
          %v1157 = vpop.f32.mrf.mxu0
          %v1158 = vadd.f32 0.0, %v1157
          %v1159 = vpop.f32.mrf.mxu0
          %v1160 = vadd.f32 0.0, %v1159
          %1161 = vmatprep.mubr.bf16.mxu0 0
          %1162 = vmatmul.mubr.bf16.gmra.mxu0 %v978
          %v1163 = vpop.f32.mrf.mxu0
          %v1164 = vadd.f32 0.0, %v1163
          %v1165 = vpop.f32.mrf.mxu0
          %v1166 = vadd.f32 0.0, %v1165
          %v1167 = vpop.f32.mrf.mxu0
          %v1168 = vadd.f32 0.0, %v1167
          %v1169 = vpop.f32.mrf.mxu0
          %v1170 = vadd.f32 0.0, %v1169
          %1171 = vmatprep.mubr.bf16.mxu0 0
          %1172 = vmatmul.mubr.bf16.gmra.mxu0 %v979
          %v1173 = vpop.f32.mrf.mxu0
          %v1174 = vadd.f32 0.0, %v1173
          %v1175 = vpop.f32.mrf.mxu0
          %v1176 = vadd.f32 0.0, %v1175
          %v1177 = vpop.f32.mrf.mxu0
          %v1178 = vadd.f32 0.0, %v1177
          %v1179 = vpop.f32.mrf.mxu0
          %v1180 = vadd.f32 0.0, %v1179
          %1181 = vmatprep.mubr.bf16.mxu0 0
          %1182 = vmatmul.mubr.bf16.gmra.mxu0 %v980
          %v1183 = vpop.f32.mrf.mxu0
          %v1184 = vadd.f32 0.0, %v1183
          %v1185 = vpop.f32.mrf.mxu0
          %v1186 = vadd.f32 0.0, %v1185
          %v1187 = vpop.f32.mrf.mxu0
          %v1188 = vadd.f32 0.0, %v1187
          %v1189 = vpop.f32.mrf.mxu0
          %v1190 = vadd.f32 0.0, %v1189
          %1191 = vmatprep.mubr.bf16.mxu0 0
          %1192 = vmatmul.mubr.bf16.gmra.mxu0 %v981
          %v1193 = vpop.f32.mrf.mxu0
          %v1194 = vadd.f32 0.0, %v1193
          %v1195 = vpop.f32.mrf.mxu0
          %v1196 = vadd.f32 0.0, %v1195
          %v1197 = vpop.f32.mrf.mxu0
          %v1198 = vadd.f32 0.0, %v1197
          %v1199 = vpop.f32.mrf.mxu0
          %v1200 = vadd.f32 0.0, %v1199
          %1201 = vmatprep.mubr.bf16.mxu0 0
          %1202 = vmatmul.mubr.bf16.gmra.mxu0 %v982
          %v1203 = vpop.f32.mrf.mxu0
          %v1204 = vadd.f32 0.0, %v1203
          %v1205 = vpop.f32.mrf.mxu0
          %v1206 = vadd.f32 0.0, %v1205
          %v1207 = vpop.f32.mrf.mxu0
          %v1208 = vadd.f32 0.0, %v1207
          %v1209 = vpop.f32.mrf.mxu0
          %v1210 = vadd.f32 0.0, %v1209
          %1211 = vdwg.mxu0
          %1212 = vst [vmem:[%s242] sm:$0xff] %v1114
          %1213 = vst [vmem:[%s242 + $0x8] sm:$0xff] %v1116
          %1214 = vst [vmem:[%s242 + $0x10] sm:$0xff] %v1118
          %1215 = vst [vmem:[%s242 + $0x18] sm:$0xff] %v1120
          %1216 = vst [vmem:[%s242 + $0x20] sm:$0xff] %v1124
          %1217 = vst [vmem:[%s242 + $0x28] sm:$0xff] %v1126
          %1218 = vst [vmem:[%s242 + $0x30] sm:$0xff] %v1128
          %1219 = vst [vmem:[%s242 + $0x38] sm:$0xff] %v1130
          %1220 = vst [vmem:[%s242 + $0x40] sm:$0xff] %v1134
          %1221 = vst [vmem:[%s242 + $0x48] sm:$0xff] %v1136
          %1222 = vst [vmem:[%s242 + $0x50] sm:$0xff] %v1138
          %1223 = vst [vmem:[%s242 + $0x58] sm:$0xff] %v1140
          %1224 = vst [vmem:[%s242 + $0x60] sm:$0xff] %v1144
          %1225 = vst [vmem:[%s242 + $0x68] sm:$0xff] %v1146
          %1226 = vst [vmem:[%s242 + $0x70] sm:$0xff] %v1148
          %1227 = vst [vmem:[%s242 + $0x78] sm:$0xff] %v1150
          %1228 = vst [vmem:[%s242 + $0x80] sm:$0xff] %v1154
          %1229 = vst [vmem:[%s242 + $0x88] sm:$0xff] %v1156
          %1230 = vst [vmem:[%s242 + $0x90] sm:$0xff] %v1158
          %1231 = vst [vmem:[%s242 + $0x98] sm:$0xff] %v1160
          %1232 = vst [vmem:[%s242 + $0xa0] sm:$0xff] %v1164
          %1233 = vst [vmem:[%s242 + $0xa8] sm:$0xff] %v1166
          %1234 = vst [vmem:[%s242 + $0xb0] sm:$0xff] %v1168
          %1235 = vst [vmem:[%s242 + $0xb8] sm:$0xff] %v1170
          %1236 = vst [vmem:[%s242 + $0xc0] sm:$0xff] %v1174
          %1237 = vst [vmem:[%s242 + $0xc8] sm:$0xff] %v1176
          %1238 = vst [vmem:[%s242 + $0xd0] sm:$0xff] %v1178
          %1239 = vst [vmem:[%s242 + $0xd8] sm:$0xff] %v1180
          %1240 = vst [vmem:[%s242 + $0xe0] sm:$0xff] %v1184
          %1241 = vst [vmem:[%s242 + $0xe8] sm:$0xff] %v1186
          %1242 = vst [vmem:[%s242 + $0xf0] sm:$0xff] %v1188
          %1243 = vst [vmem:[%s242 + $0xf8] sm:$0xff] %v1190
          %1244 = vst [vmem:[%s242 + $0x100] sm:$0xff] %v1194
          %1245 = vst [vmem:[%s242 + $0x108] sm:$0xff] %v1196
          %1246 = vst [vmem:[%s242 + $0x110] sm:$0xff] %v1198
          %1247 = vst [vmem:[%s242 + $0x118] sm:$0xff] %v1200
          %1248 = vst [vmem:[%s242 + $0x120] sm:$0xff] %v1204
          %1249 = vst [vmem:[%s242 + $0x128] sm:$0xff] %v1206
          %1250 = vst [vmem:[%s242 + $0x130] sm:$0xff] %v1208
          %1251 = vst [vmem:[%s242 + $0x138] sm:$0xff] %v1210
        $region52: #{tpu_custom_call.1} parent=31 // pred_fallthru
          _
        %s1252 = sand.u32 %s116, 1
        %s1253 = scalar_lea.sflag [#allocation5], %s1252
        %s1254 = sand.u32 %s116, 1
        %s1255 = smul.addr %s1254, 320
        %s1256 = scalar_lea.vmem [#allocation9], %s1255
        // Predicated region
        $region53: #{tpu_custom_call.1} parent=31 // pred_check
          %p1257 = pneg %p126
        $region54: #{tpu_custom_call.1} parent=31 // pred_check_branch
          %1259 = sbr.rel (%p1257) target = $region56
        $region55: #{tpu_custom_call.1} parent=31 // pred_region
          %s1260 = smul.u32 20, %s25
          %s1262 = ssub.s32 5120, 5120
          %1263 = vsyncadd %s1253, %s1262
          %s1264 = smul.addr %s1260, 2
          %s1265 = smul.addr %s1264, 128
          %s1266 = scalar_lea.hbm %s3, %s1265
          %s1267 = sshll.u32 %s1256, 4
          %s1268 = int_to_ptr.vmem [resolvable:$true] %s1267
          %1273 = dma.vmem_to_hbm [thread:$0]  %s1268, 5120, %s1266, %s1253, 256, 256, 16
        $region56: #{tpu_custom_call.1} parent=31 // pred_fallthru
          _
      $region32: #{tpu_custom_call.1} parent=5 // pred_fallthru
        _
      %p1274 = scmp.le.s32.totalorder 2, %s16
      // Predicated region
      $region57: #{tpu_custom_call.1} parent=5 // pred_check
        %p1275 = pneg %p1274
      $region58: #{tpu_custom_call.1} parent=5 // pred_check_branch
        %1277 = sbr.rel (%p1275) target = $region60
      $region59: #{tpu_custom_call.1} parent=5 // pred_region
        %s1278 = ssub.s32 %s16, 2
        // Predicated region
        $region61: #{tpu_custom_call.1} parent=59 // pred_check
          %p1279 = pneg %p132
        $region62: #{tpu_custom_call.1} parent=59 // pred_check_branch
          %1281 = sbr.rel (%p1279) target = $region64
        $region63: #{tpu_custom_call.1} parent=59 // pred_region
          %s1282 = sand.u32 %s117, 1
          %s1283 = scalar_lea.sflag [#allocation5], %s1282
          %s1284 = sand.u32 %s117, 1
          %s1285 = smul.addr %s1284, 320
          %s1286 = scalar_lea.vmem [#allocation9], %s1285
          %1287 = dma.done %s1283, 5120
        $region64: #{tpu_custom_call.1} parent=59 // pred_fallthru
          _
      $region60: #{tpu_custom_call.1} parent=5 // pred_fallthru
        _
    $region6: #{tpu_custom_call.1} parent=1 // loop_footer
      %s20 = sadd.s32 1, %s16
    $region7: #{tpu_custom_call.1} parent=1 // loop_footer_branch
      %15 = sbr.rel target = $region3
    $region8: #{tpu_custom_call.1} parent=1 // loop_exit
      _
    %1288 = vsyncpa [#allocation4], 1
    %s1289 = scalar_lea.sflag [#allocation4], 1
    %1290 = vsyncpa %s1289, 1
    %1291 = vsyncpa [#allocation7], 1
    %1292 = vsyncpa [#allocation5], 1
    %s1293 = scalar_lea.sflag [#allocation5], 1
    %1294 = vsyncpa %s1293, 1

// kernel: tpu_custom_call.1
$region0: #{tpu_custom_call.1}
  #allocation0 [shape = 'u32[]', space=smem, size = 0x4, offset = 0x4, fixed_abs, tag = 'smem constant byte address 0x4 - core index']
  #allocation1 [shape = 'u32[144,128]{1,0:T(1,128)}', space=vmem, size = 0x12000, scoped, tag = 'internal scratch']
  #allocation2 [shape = 'f32[160,128]{1,0:T(8,128)}', space=vmem, size = 0x14000, scoped, tag = 'scratch operand']
  %s0 = inlined_call_operand.hbm [shape: bf16[320,384], index: 0, kind: input, shape index: {}]
  %s1 = inlined_call_operand.hbm [shape: bf16[384,128], index: 1, kind: input, shape index: {}]
  %s2 = inlined_call_operand.hbm [shape: bf16[128,256], index: 2, kind: input, shape index: {}]
  %s3 = inlined_call_operand.hbm [shape: f32[320,256], index: 3, kind: output, shape index: {}]
  %s4 = sld [smem:[#allocation0]]
  $region65: #{tpu_custom_call.1} parent=0
    _
  %s6 = ssub.s32 1, %s4
  %s7 = scalar_select 0, %s6, %s4
  $region1: #{tpu_custom_call.1} parent=0
    #allocation3 [shape = 'u8[245760]{0}', space=vmem, size = 0x3c000, scoped, tag = 'input window, operand 0']
    #allocation4 [shape = 's32[2]{0}', space=sflag, size = 0x8, scoped, tag = 'scoped memory for tpu_custom_call.1']
    #allocation5 [shape = 's32[2]{0}', space=sflag, size = 0x8, scoped, tag = 'scoped memory for tpu_custom_call.1']
    #allocation6 [shape = 'u8[98304]{0}', space=vmem, size = 0x18000, scoped, tag = 'input window, operand 1, single buffered']
    #allocation7 [shape = 's32[1]{0}', space=sflag, size = 0x4, scoped, tag = 'scoped memory for tpu_custom_call.1']
    #allocation8 [shape = 'u8[65536]{0}', space=vmem, size = 0x10000, scoped, tag = 'input window, operand 2, single buffered']
    #allocation9 [shape = 'u8[327680]{0}', space=vmem, size = 0x50000, scoped, tag = 'output window, operand 0']
    %8 = vsyncpa [#allocation4], 0
    %s9 = scalar_lea.sflag [#allocation4], 1
    %10 = vsyncpa %s9, 0
    %11 = vsyncpa [#allocation7], 0
    %12 = vsyncpa [#allocation5], 0
    %s13 = scalar_lea.sflag [#allocation5], 1
    %14 = vsyncpa %s13, 0
    loop: start=0, step=1, limit=4
    $region2: #{tpu_custom_call.1} parent=1 // loop_pre_header
      _
    $region3: #{tpu_custom_call.1} parent=1 // loop_header
      %s16 = sphi 0, %s20
      %p17 = scmp.ge.s32.totalorder %s16, 4
      %s23 = sphi 0, %s35
      %s24 = sphi 0, %s31
      %s25 = sphi 0, %s23
      %s26 = sphi 0, %s24
      %s27 = sphi 0, %s25
      %s28 = sphi 0, %s26
      %s40 = sphi 0, %s42
      %s43 = sphi 0, %s40
      %s44 = sphi 0, %s43
      %s60 = sphi 0, %s44
      %s66 = sphi 0, %s68
      %s69 = sphi 0, %s66
      %s70 = sphi 0, %s69
      %s86 = sphi 0, %s70
      %s90 = sphi 0, %s90
      %s92 = sphi 0, %s90
      %s93 = sphi 0, %s92
      %s107 = sphi 0, %s93
      %s113 = sphi 0, %s115
      %s116 = sphi 0, %s113
      %s117 = sphi 0, %s116
      %s133 = sphi 0, %s117
    $region4: #{tpu_custom_call.1} parent=1 // loop_header_branch
      %19 = sbr.rel (%p17) target = $region8
    $region5: #{tpu_custom_call.1} parent=1 // loop_body
      %s21 = ssub.s32 %s16, 1
      %s22 = ssub.s32 %s16, 2
      %s29 = sadd.s32 1, %s24
      %p30 = scmp.ge.s32.totalorder %s29, 1
      %s31 = scalar_select %p30, 0, %s29
      %s32 = sadd.s32 1, %s23
      %s33 = scalar_select %p30, %s32, %s23
      %p34 = scmp.ge.s32.totalorder %s33, 2
      %s35 = scalar_select %p34, 0, %s33
      %s36 = ssub.s32 %s23, %s35
      %s37 = ssub.s32 %s24, %s31
      %s38 = sor.u32 %s36, %s37
      %p39 = scmp.eq.s32.totalorder %s38, 0
      %s41 = sadd.s32 %s40, 1
      %s42 = scalar_select %p39, %s40, %s41
      %p45 = pneg %p39
      %p46 = scmp.eq.s32.totalorder %s16, 1
      %p47 = por %p45, %p46
      %p48 = scmp.ne.s32.totalorder %s40, %s43
      %p49 = scmp.eq.s32.totalorder %s16, 0
      %p50 = por %p48, %p49
      %p51 = scmp.ne.s32.totalorder %s40, %s43
      %p52 = scmp.eq.s32.totalorder %s21, 1
      %p53 = por %p51, %p52
      %p54 = scmp.ne.s32.totalorder %s43, %s44
      %p55 = scmp.eq.s32.totalorder %s21, 0
      %p56 = por %p54, %p55
      %p57 = scmp.ne.s32.totalorder %s43, %s44
      %p58 = scmp.eq.s32.totalorder %s22, 1
      %p59 = por %p57, %p58
      %p61 = scmp.ne.s32.totalorder %s44, %s60
      %p62 = scmp.eq.s32.totalorder %s22, 0
      %p63 = por %p61, %p62
      %s64 = ssub.s32 %s24, %s31
      %p65 = scmp.eq.s32.totalorder %s64, 0
      %s67 = sadd.s32 %s66, 1
      %s68 = scalar_select %p65, %s66, %s67
      %p71 = pneg %p65
      %p72 = scmp.eq.s32.totalorder %s16, 1
      %p73 = por %p71, %p72
      %p74 = scmp.ne.s32.totalorder %s66, %s69
      %p75 = scmp.eq.s32.totalorder %s16, 0
      %p76 = por %p74, %p75
      %p77 = scmp.ne.s32.totalorder %s66, %s69
      %p78 = scmp.eq.s32.totalorder %s21, 1
      %p79 = por %p77, %p78
      %p80 = scmp.ne.s32.totalorder %s69, %s70
      %p81 = scmp.eq.s32.totalorder %s21, 0
      %p82 = por %p80, %p81
      %p83 = scmp.ne.s32.totalorder %s69, %s70
      %p84 = scmp.eq.s32.totalorder %s22, 1
      %p85 = por %p83, %p84
      %p87 = scmp.ne.s32.totalorder %s70, %s86
      %p88 = scmp.eq.s32.totalorder %s22, 0
      %p89 = por %p87, %p88
      %s91 = sadd.s32 %s90, 1
      %p94 = scmp.eq.s32.totalorder %s16, 1
      %p95 = scmp.ne.s32.totalorder %s90, %s92
      %p96 = scmp.eq.s32.totalorder %s16, 0
      %p97 = por %p95, %p96
      %p98 = scmp.ne.s32.totalorder %s90, %s92
      %p99 = scmp.eq.s32.totalorder %s21, 1
      %p100 = por %p98, %p99
      %p101 = scmp.ne.s32.totalorder %s92, %s93
      %p102 = scmp.eq.s32.totalorder %s21, 0
      %p103 = por %p101, %p102
      %p104 = scmp.ne.s32.totalorder %s92, %s93
      %p105 = scmp.eq.s32.totalorder %s22, 1
      %p106 = por %p104, %p105
      %p108 = scmp.ne.s32.totalorder %s93, %s107
      %p109 = scmp.eq.s32.totalorder %s22, 0
      %p110 = por %p108, %p109
      %s111 = ssub.s32 %s23, %s35
      %p112 = scmp.eq.s32.totalorder %s111, 0
      %s114 = sadd.s32 %s113, 1
      %s115 = scalar_select %p112, %s113, %s114
      %p118 = pneg %p112
      %p119 = scmp.eq.s32.totalorder %s16, 1
      %p120 = por %p118, %p119
      %p121 = scmp.ne.s32.totalorder %s113, %s116
      %p122 = scmp.eq.s32.totalorder %s16, 0
      %p123 = por %p121, %p122
      %p124 = scmp.ne.s32.totalorder %s113, %s116
      %p125 = scmp.eq.s32.totalorder %s21, 1
      %p126 = por %p124, %p125
      %p127 = scmp.ne.s32.totalorder %s116, %s117
      %p128 = scmp.eq.s32.totalorder %s21, 0
      %p129 = por %p127, %p128
      %p130 = scmp.ne.s32.totalorder %s116, %s117
      %p131 = scmp.eq.s32.totalorder %s22, 1
      %p132 = por %p130, %p131
      %p134 = scmp.ne.s32.totalorder %s117, %s133
      %p135 = scmp.eq.s32.totalorder %s22, 0
      %p136 = por %p134, %p135
      %p137 = scmp.le.s32.totalorder 1, %s16
      %p138 = scmp.lt.s32.totalorder %s16, 3
      %p139 = pnand %p137, %p138
      %p140 = pneg %p139
      // Predicated region
      $region9: #{tpu_custom_call.1} parent=5 // pred_check
        _
      $region10: #{tpu_custom_call.1} parent=5 // pred_check_branch
        %142 = sbr.rel (%p139) target = $region12
      $region11: #{tpu_custom_call.1} parent=5 // pred_region
        %s143 = ssub.s32 %s16, 1
        // Predicated region
        $region13: #{tpu_custom_call.1} parent=11 // pred_check
          %p144 = pneg %p82
        $region14: #{tpu_custom_call.1} parent=11 // pred_check_branch
          %146 = sbr.rel (%p144) target = $region16
        $region15: #{tpu_custom_call.1} parent=11 // pred_region
          %s147 = smul.u32 48, %s26
          %s149 = ssub.s32 3072, 3072
          %150 = vsyncadd [#allocation7], %s149
          %s151 = smul.addr %s147, 64
          %s152 = scalar_lea.hbm %s1, %s151
          %s153 = sshll.u32 [#allocation6], 4
          %s154 = int_to_ptr.vmem [resolvable:$true] %s153
          %159 = dma.hbm_to_vmem [thread:$0]  %s152, 3072, %s154, [#allocation7], 64, 64, 4
        $region16: #{tpu_custom_call.1} parent=11 // pred_fallthru
          _
        // Predicated region
        $region17: #{tpu_custom_call.1} parent=11 // pred_check
          %p160 = pneg %p103
        $region18: #{tpu_custom_call.1} parent=11 // pred_check_branch
          %162 = sbr.rel (%p160) target = $region20
        $region19: #{tpu_custom_call.1} parent=11 // pred_region
          %s164 = ssub.s32 2048, 2048
          %165 = vsyncadd [#allocation7], %s164
          %s166 = sshll.u32 [#allocation8], 4
          %s167 = int_to_ptr.vmem [resolvable:$true] %s166
          %172 = dma.hbm_to_vmem [thread:$0]  %s2, 2048, %s167, [#allocation7], 128, 128, 8
        $region20: #{tpu_custom_call.1} parent=11 // pred_fallthru
          _
      $region12: #{tpu_custom_call.1} parent=5 // pred_fallthru
        _
      %p173 = scmp.lt.s32.totalorder %s16, 2
      // Predicated region
      $region21: #{tpu_custom_call.1} parent=5 // pred_check
        %p174 = pneg %p173
      $region22: #{tpu_custom_call.1} parent=5 // pred_check_branch
        %176 = sbr.rel (%p174) target = $region24
      $region23: #{tpu_custom_call.1} parent=5 // pred_region
        // Predicated region
        $region25: #{tpu_custom_call.1} parent=23 // pred_check
          %p177 = pneg %p50
        $region26: #{tpu_custom_call.1} parent=23 // pred_check_branch
          %179 = sbr.rel (%p177) target = $region28
        $region27: #{tpu_custom_call.1} parent=23 // pred_region
          %s180 = sand.u32 %s40, 1
          %s181 = scalar_lea.sflag [#allocation4], %s180
          %s182 = sand.u32 %s40, 1
          %s183 = smul.addr %s182, 240
          %s184 = scalar_lea.vmem [#allocation3], %s183
          %s185 = smul.u32 20, %s23
          %s186 = smul.u32 3, %s24
          %s188 = ssub.s32 3840, 3840
          %189 = vsyncadd %s181, %s188
          %s190 = smul.addr %s185, 3
          %s191 = sadd.s32 %s186, %s190
          %s192 = smul.addr %s191, 64
          %s193 = scalar_lea.hbm %s0, %s192
          %s194 = sshll.u32 %s184, 4
          %s195 = int_to_ptr.vmem [resolvable:$true] %s194
          %200 = dma.hbm_to_vmem [thread:$0]  %s193, 3840, %s195, %s181, 192, 192, 12
        $region28: #{tpu_custom_call.1} parent=23 // pred_fallthru
          _
      $region24: #{tpu_custom_call.1} parent=5 // pred_fallthru
        _
      %p201 = scmp.le.s32.totalorder 1, %s16
      %p202 = scmp.lt.s32.totalorder %s16, 3
      %p203 = pnand %p201, %p202
      %p204 = pneg %p203
      // Predicated region
      $region29: #{tpu_custom_call.1} parent=5 // pred_check
        _
      $region30: #{tpu_custom_call.1} parent=5 // pred_check_branch
        %206 = sbr.rel (%p203) target = $region32
      $region31: #{tpu_custom_call.1} parent=5 // pred_region
        %s207 = ssub.s32 %s16, 1
        %s208 = sand.u32 %s43, 1
        %s209 = scalar_lea.sflag [#allocation4], %s208
        %s210 = sand.u32 %s43, 1
        %s211 = smul.addr %s210, 240
        %s212 = scalar_lea.vmem [#allocation3], %s211
        // Predicated region
        $region33: #{tpu_custom_call.1} parent=31 // pred_check
          %p213 = pneg %p56
        $region34: #{tpu_custom_call.1} parent=31 // pred_check_branch
          %215 = sbr.rel (%p213) target = $region36
        $region35: #{tpu_custom_call.1} parent=31 // pred_region
          %216 = dma.done %s209, 3840
        $region36: #{tpu_custom_call.1} parent=31 // pred_fallthru
          _
        // Predicated region
        $region37: #{tpu_custom_call.1} parent=31 // pred_check
          %p217 = pneg %p82
        $region38: #{tpu_custom_call.1} parent=31 // pred_check_branch
          %219 = sbr.rel (%p217) target = $region40
        $region39: #{tpu_custom_call.1} parent=31 // pred_region
          %220 = dma.done [#allocation7], 3072
        $region40: #{tpu_custom_call.1} parent=31 // pred_fallthru
          _
        // Predicated region
        $region41: #{tpu_custom_call.1} parent=31 // pred_check
          %p221 = pneg %p103
        $region42: #{tpu_custom_call.1} parent=31 // pred_check_branch
          %223 = sbr.rel (%p221) target = $region44
        $region43: #{tpu_custom_call.1} parent=31 // pred_region
          %224 = dma.done [#allocation7], 2048
        $region44: #{tpu_custom_call.1} parent=31 // pred_fallthru
          _
        %s225 = sand.u32 %s43, 1
        %s226 = scalar_lea.sflag [#allocation4], %s225
        %s227 = sand.u32 %s43, 1
        %s228 = smul.addr %s227, 240
        %s229 = scalar_lea.vmem [#allocation3], %s228
        %p230 = pneg %p56
        %p231 = pneg %p53
        %p232 = pneg %p82
        %p233 = pneg %p79
        %p234 = pneg %p103
        %p235 = pneg %p100
        %p236 = pneg %p129
        %p237 = pneg %p126
        %s238 = sand.u32 %s116, 1
        %s239 = scalar_lea.sflag [#allocation5], %s238
        %s240 = sand.u32 %s116, 1
        %s241 = smul.addr %s240, 320
        %s242 = scalar_lea.vmem [#allocation9], %s241
        %s243 = smul.u32 20, %s25
        %s244 = smul.u32 3, %s26
        %s245 = smul.u32 48, %s26
        %s246 = smul.u32 20, %s25
        %p248 = scmp.eq.s32.totalorder %s26, 0
        // Predicated region
        $region45: #{tpu_custom_call.1} parent=31 // pred_check
          %p249 = pneg %p248
        $region46: #{tpu_custom_call.1} parent=31 // pred_check_branch
          %251 = sbr.rel (%p249) target = $region48
        $region47: #{tpu_custom_call.1} parent=31 // pred_region
          %252 = vst [vmem:[#allocation2] sm:$0xff] 0.0
          %253 = vst [vmem:[#allocation2 + $0x8] sm:$0xff] 0.0
          %254 = vst [vmem:[#allocation2 + $0x10] sm:$0xff] 0.0
          %255 = vst [vmem:[#allocation2 + $0x18] sm:$0xff] 0.0
          %256 = vst [vmem:[#allocation2 + $0x20] sm:$0xff] 0.0
          %257 = vst [vmem:[#allocation2 + $0x28] sm:$0xff] 0.0
          %258 = vst [vmem:[#allocation2 + $0x30] sm:$0xff] 0.0
          %259 = vst [vmem:[#allocation2 + $0x38] sm:$0xff] 0.0
          %260 = vst [vmem:[#allocation2 + $0x40] sm:$0xff] 0.0
          %261 = vst [vmem:[#allocation2 + $0x48] sm:$0xff] 0.0
          %262 = vst [vmem:[#allocation2 + $0x50] sm:$0xff] 0.0
          %263 = vst [vmem:[#allocation2 + $0x58] sm:$0xff] 0.0
          %264 = vst [vmem:[#allocation2 + $0x60] sm:$0xff] 0.0
          %265 = vst [vmem:[#allocation2 + $0x68] sm:$0xff] 0.0
          %266 = vst [vmem:[#allocation2 + $0x70] sm:$0xff] 0.0
          %267 = vst [vmem:[#allocation2 + $0x78] sm:$0xff] 0.0
          %268 = vst [vmem:[#allocation2 + $0x80] sm:$0xff] 0.0
          %269 = vst [vmem:[#allocation2 + $0x88] sm:$0xff] 0.0
          %270 = vst [vmem:[#allocation2 + $0x90] sm:$0xff] 0.0
          %271 = vst [vmem:[#allocation2 + $0x98] sm:$0xff] 0.0
        $region48: #{tpu_custom_call.1} parent=31 // pred_fallthru
          _
        %v272 = vld [vmem:[#allocation2] sm:$0xff]
        %v273 = vld [vmem:[#allocation2 + $0x8] sm:$0xff]
        %v274 = vld [vmem:[#allocation2 + $0x10] sm:$0xff]
        %v275 = vld [vmem:[#allocation2 + $0x18] sm:$0xff]
        %v276 = vld [vmem:[#allocation2 + $0x20] sm:$0xff]
        %v277 = vld [vmem:[#allocation2 + $0x28] sm:$0xff]
        %v278 = vld [vmem:[#allocation2 + $0x30] sm:$0xff]
        %v279 = vld [vmem:[#allocation2 + $0x38] sm:$0xff]
        %v280 = vld [vmem:[#allocation2 + $0x40] sm:$0xff]
        %v281 = vld [vmem:[#allocation2 + $0x48] sm:$0xff]
        %v282 = vld [vmem:[#allocation2 + $0x50] sm:$0xff]
        %v283 = vld [vmem:[#allocation2 + $0x58] sm:$0xff]
        %v284 = vld [vmem:[#allocation2 + $0x60] sm:$0xff]
        %v285 = vld [vmem:[#allocation2 + $0x68] sm:$0xff]
        %v286 = vld [vmem:[#allocation2 + $0x70] sm:$0xff]
        %v287 = vld [vmem:[#allocation2 + $0x78] sm:$0xff]
        %v288 = vld [vmem:[#allocation2 + $0x80] sm:$0xff]
        %v289 = vld [vmem:[#allocation2 + $0x88] sm:$0xff]
        %v290 = vld [vmem:[#allocation2 + $0x90] sm:$0xff]
        %v291 = vld [vmem:[#allocation2 + $0x98] sm:$0xff]
        %v292 = vld [vmem:[%s212] sm:$0xff]
        %v293 = vld [vmem:[%s212 + $0x8] sm:$0xf]
        %v294 = vld [vmem:[%s212 + $0xc] sm:$0xff]
        %v295 = vld [vmem:[%s212 + $0x14] sm:$0xf]
        %v296 = vld [vmem:[%s212 + $0x18] sm:$0xff]
        %v297 = vld [vmem:[%s212 + $0x20] sm:$0xf]
        %v298 = vld [vmem:[%s212 + $0x24] sm:$0xff]
        %v299 = vld [vmem:[%s212 + $0x2c] sm:$0xf]
        %v300 = vld [vmem:[%s212 + $0x30] sm:$0xff]
        %v301 = vld [vmem:[%s212 + $0x38] sm:$0xf]
        %v302 = vld [vmem:[%s212 + $0x3c] sm:$0xff]
        %v303 = vld [vmem:[%s212 + $0x44] sm:$0xf]
        %v304 = vld [vmem:[%s212 + $0x48] sm:$0xff]
        %v305 = vld [vmem:[%s212 + $0x50] sm:$0xf]
        %v306 = vld [vmem:[%s212 + $0x54] sm:$0xff]
        %v307 = vld [vmem:[%s212 + $0x5c] sm:$0xf]
        %v308 = vld [vmem:[%s212 + $0x60] sm:$0xff]
        %v309 = vld [vmem:[%s212 + $0x68] sm:$0xf]
        %v310 = vld [vmem:[%s212 + $0x6c] sm:$0xff]
        %v311 = vld [vmem:[%s212 + $0x74] sm:$0xf]
        %v312 = vld [vmem:[%s212 + $0x78] sm:$0xff]
        %v313 = vld [vmem:[%s212 + $0x80] sm:$0xf]
        %v314 = vld [vmem:[%s212 + $0x84] sm:$0xff]
        %v315 = vld [vmem:[%s212 + $0x8c] sm:$0xf]
        %v316 = vld [vmem:[%s212 + $0x90] sm:$0xff]
        %v317 = vld [vmem:[%s212 + $0x98] sm:$0xf]
        %v318 = vld [vmem:[%s212 + $0x9c] sm:$0xff]
        %v319 = vld [vmem:[%s212 + $0xa4] sm:$0xf]
        %v320 = vld [vmem:[%s212 + $0xa8] sm:$0xff]
        %v321 = vld [vmem:[%s212 + $0xb0] sm:$0xf]
        %v322 = vld [vmem:[%s212 + $0xb4] sm:$0xff]
        %v323 = vld [vmem:[%s212 + $0xbc] sm:$0xf]
        %v324 = vld [vmem:[%s212 + $0xc0] sm:$0xff]
        %v325 = vld [vmem:[%s212 + $0xc8] sm:$0xf]
        %v326 = vld [vmem:[%s212 + $0xcc] sm:$0xff]
        %v327 = vld [vmem:[%s212 + $0xd4] sm:$0xf]
        %v328 = vld [vmem:[%s212 + $0xd8] sm:$0xff]
        %v329 = vld [vmem:[%s212 + $0xe0] sm:$0xf]
        %v330 = vld [vmem:[%s212 + $0xe4] sm:$0xff]
        %v331 = vld [vmem:[%s212 + $0xec] sm:$0xf]
        %v332 = vld [vmem:[#allocation6] sm:$0xf]
        %v333 = vld [vmem:[#allocation6 + $0x4] sm:$0xf]
        %v334 = vld [vmem:[#allocation6 + $0x8] sm:$0xf]
        %v335 = vld [vmem:[#allocation6 + $0xc] sm:$0xf]
        %v336 = vld [vmem:[#allocation6 + $0x10] sm:$0xf]
        %v337 = vld [vmem:[#allocation6 + $0x14] sm:$0xf]
        %v338 = vld [vmem:[#allocation6 + $0x18] sm:$0xf]
        %v339 = vld [vmem:[#allocation6 + $0x1c] sm:$0xf]
        %v340 = vld [vmem:[#allocation6 + $0x20] sm:$0xf]
        %v341 = vld [vmem:[#allocation6 + $0x24] sm:$0xf]
        %v342 = vld [vmem:[#allocation6 + $0x28] sm:$0xf]
        %v343 = vld [vmem:[#allocation6 + $0x2c] sm:$0xf]
        %v344 = vld [vmem:[#allocation6 + $0x30] sm:$0xf]
        %v345 = vld [vmem:[#allocation6 + $0x34] sm:$0xf]
        %v346 = vld [vmem:[#allocation6 + $0x38] sm:$0xf]
        %v347 = vld [vmem:[#allocation6 + $0x3c] sm:$0xf]
        %v348 = vld [vmem:[#allocation6 + $0x40] sm:$0xf]
        %v349 = vld [vmem:[#allocation6 + $0x44] sm:$0xf]
        %v350 = vld [vmem:[#allocation6 + $0x48] sm:$0xf]
        %v351 = vld [vmem:[#allocation6 + $0x4c] sm:$0xf]
        %v352 = vld [vmem:[#allocation6 + $0x50] sm:$0xf]
        %v353 = vld [vmem:[#allocation6 + $0x54] sm:$0xf]
        %v354 = vld [vmem:[#allocation6 + $0x58] sm:$0xf]
        %v355 = vld [vmem:[#allocation6 + $0x5c] sm:$0xf]
        %v356 = vld [vmem:[#allocation6 + $0x60] sm:$0xf]
        %v357 = vld [vmem:[#allocation6 + $0x64] sm:$0xf]
        %v358 = vld [vmem:[#allocation6 + $0x68] sm:$0xf]
        %v359 = vld [vmem:[#allocation6 + $0x6c] sm:$0xf]
        %v360 = vld [vmem:[#allocation6 + $0x70] sm:$0xf]
        %v361 = vld [vmem:[#allocation6 + $0x74] sm:$0xf]
        %v362 = vld [vmem:[#allocation6 + $0x78] sm:$0xf]
        %v363 = vld [vmem:[#allocation6 + $0x7c] sm:$0xf]
        %v364 = vld [vmem:[#allocation6 + $0x80] sm:$0xf]
        %v365 = vld [vmem:[#allocation6 + $0x84] sm:$0xf]
        %v366 = vld [vmem:[#allocation6 + $0x88] sm:$0xf]
        %v367 = vld [vmem:[#allocation6 + $0x8c] sm:$0xf]
        %v368 = vld [vmem:[#allocation6 + $0x90] sm:$0xf]
        %v369 = vld [vmem:[#allocation6 + $0x94] sm:$0xf]
        %v370 = vld [vmem:[#allocation6 + $0x98] sm:$0xf]
        %v371 = vld [vmem:[#allocation6 + $0x9c] sm:$0xf]
        %v372 = vld [vmem:[#allocation6 + $0xa0] sm:$0xf]
        %v373 = vld [vmem:[#allocation6 + $0xa4] sm:$0xf]
        %v374 = vld [vmem:[#allocation6 + $0xa8] sm:$0xf]
        %v375 = vld [vmem:[#allocation6 + $0xac] sm:$0xf]
        %v376 = vld [vmem:[#allocation6 + $0xb0] sm:$0xf]
        %v377 = vld [vmem:[#allocation6 + $0xb4] sm:$0xf]
        %v378 = vld [vmem:[#allocation6 + $0xb8] sm:$0xf]
        %v379 = vld [vmem:[#allocation6 + $0xbc] sm:$0xf]
        %v420 = vunpack.c.l.b16 %v292
        %v421 = vunpack.c.h.b16 %v292
        %v422 = vunpack.c.l.b16 %v293
        %v423 = vunpack.c.l.b16 %v294
        %v424 = vunpack.c.h.b16 %v294
        %v425 = vunpack.c.l.b16 %v295
        %v426 = vunpack.c.l.b16 %v296
        %v427 = vunpack.c.h.b16 %v296
        %v428 = vunpack.c.l.b16 %v297
        %v429 = vunpack.c.l.b16 %v298
        %v430 = vunpack.c.h.b16 %v298
        %v431 = vunpack.c.l.b16 %v299
        %v432 = vunpack.c.l.b16 %v300
        %v433 = vunpack.c.h.b16 %v300
        %v434 = vunpack.c.l.b16 %v301
        %v435 = vunpack.c.l.b16 %v302
        %v436 = vunpack.c.h.b16 %v302
        %v437 = vunpack.c.l.b16 %v303
        %v438 = vunpack.c.l.b16 %v304
        %v439 = vunpack.c.h.b16 %v304
        %v440 = vunpack.c.l.b16 %v305
        %v441 = vunpack.c.l.b16 %v306
        %v442 = vunpack.c.h.b16 %v306
        %v443 = vunpack.c.l.b16 %v307
        %v444 = vunpack.c.l.b16 %v308
        %v445 = vunpack.c.h.b16 %v308
        %v446 = vunpack.c.l.b16 %v309
        %v447 = vunpack.c.l.b16 %v310
        %v448 = vunpack.c.h.b16 %v310
        %v449 = vunpack.c.l.b16 %v311
        %v450 = vunpack.c.l.b16 %v312
        %v451 = vunpack.c.h.b16 %v312
        %v452 = vunpack.c.l.b16 %v313
        %v453 = vunpack.c.l.b16 %v314
        %v454 = vunpack.c.h.b16 %v314
        %v455 = vunpack.c.l.b16 %v315
        %v456 = vunpack.c.l.b16 %v316
        %v457 = vunpack.c.h.b16 %v316
        %v458 = vunpack.c.l.b16 %v317
        %v459 = vunpack.c.l.b16 %v318
        %v460 = vunpack.c.h.b16 %v318
        %v461 = vunpack.c.l.b16 %v319
        %v462 = vunpack.c.l.b16 %v320
        %v463 = vunpack.c.h.b16 %v320
        %v464 = vunpack.c.l.b16 %v321
        %v465 = vunpack.c.l.b16 %v322
        %v466 = vunpack.c.h.b16 %v322
        %v467 = vunpack.c.l.b16 %v323
        %v468 = vunpack.c.l.b16 %v324
        %v469 = vunpack.c.h.b16 %v324
        %v470 = vunpack.c.l.b16 %v325
        %v471 = vunpack.c.l.b16 %v326
        %v472 = vunpack.c.h.b16 %v326
        %v473 = vunpack.c.l.b16 %v327
        %v474 = vunpack.c.l.b16 %v328
        %v475 = vunpack.c.h.b16 %v328
        %v476 = vunpack.c.l.b16 %v329
        %v477 = vunpack.c.l.b16 %v330
        %v478 = vunpack.c.h.b16 %v330
        %v479 = vunpack.c.l.b16 %v331
        %v480 = vpack.c.b16 %v423, %v420
        %v481 = vpack.c.b16 %v424, %v421
        %v482 = vpack.c.b16 %v425, %v422
        %v483 = vpack.c.b16 %v429, %v426
        %v484 = vpack.c.b16 %v430, %v427
        %v485 = vpack.c.b16 %v431, %v428
        %v486 = vpack.c.b16 %v435, %v432
        %v487 = vpack.c.b16 %v436, %v433
        %v488 = vpack.c.b16 %v437, %v434
        %v489 = vpack.c.b16 %v441, %v438
        %v490 = vpack.c.b16 %v442, %v439
        %v491 = vpack.c.b16 %v443, %v440
        %v492 = vpack.c.b16 %v447, %v444
        %v493 = vpack.c.b16 %v448, %v445
        %v494 = vpack.c.b16 %v449, %v446
        %v495 = vpack.c.b16 %v453, %v450
        %v496 = vpack.c.b16 %v454, %v451
        %v497 = vpack.c.b16 %v455, %v452
        %v498 = vpack.c.b16 %v459, %v456
        %v499 = vpack.c.b16 %v460, %v457
        %v500 = vpack.c.b16 %v461, %v458
        %v501 = vpack.c.b16 %v465, %v462
        %v502 = vpack.c.b16 %v466, %v463
        %v503 = vpack.c.b16 %v467, %v464
        %v504 = vpack.c.b16 %v471, %v468
        %v505 = vpack.c.b16 %v472, %v469
        %v506 = vpack.c.b16 %v473, %v470
        %v507 = vpack.c.b16 %v477, %v474
        %v508 = vpack.c.b16 %v478, %v475
        %v509 = vpack.c.b16 %v479, %v476
        %v588 = vunpack.c.l.b16 %v332
        %v589 = vunpack.c.l.b16 %v333
        %v590 = vunpack.c.l.b16 %v334
        %v591 = vunpack.c.l.b16 %v335
        %v592 = vunpack.c.l.b16 %v336
        %v593 = vunpack.c.l.b16 %v337
        %v594 = vunpack.c.l.b16 %v338
        %v595 = vunpack.c.l.b16 %v339
        %v596 = vunpack.c.l.b16 %v340
        %v597 = vunpack.c.l.b16 %v341
        %v598 = vunpack.c.l.b16 %v342
        %v599 = vunpack.c.l.b16 %v343
        %v600 = vunpack.c.l.b16 %v344
        %v601 = vunpack.c.l.b16 %v345
        %v602 = vunpack.c.l.b16 %v346
        %v603 = vunpack.c.l.b16 %v347
        %v604 = vunpack.c.l.b16 %v348
        %v605 = vunpack.c.l.b16 %v349
        %v606 = vunpack.c.l.b16 %v350
        %v607 = vunpack.c.l.b16 %v351
        %v608 = vunpack.c.l.b16 %v352
        %v609 = vunpack.c.l.b16 %v353
        %v610 = vunpack.c.l.b16 %v354
        %v611 = vunpack.c.l.b16 %v355
        %v612 = vunpack.c.l.b16 %v356
        %v613 = vunpack.c.l.b16 %v357
        %v614 = vunpack.c.l.b16 %v358
        %v615 = vunpack.c.l.b16 %v359
        %v616 = vunpack.c.l.b16 %v360
        %v617 = vunpack.c.l.b16 %v361
        %v618 = vunpack.c.l.b16 %v362
        %v619 = vunpack.c.l.b16 %v363
        %v620 = vunpack.c.l.b16 %v364
        %v621 = vunpack.c.l.b16 %v365
        %v622 = vunpack.c.l.b16 %v366
        %v623 = vunpack.c.l.b16 %v367
        %v624 = vunpack.c.l.b16 %v368
        %v625 = vunpack.c.l.b16 %v369
        %v626 = vunpack.c.l.b16 %v370
        %v627 = vunpack.c.l.b16 %v371
        %v628 = vunpack.c.l.b16 %v372
        %v629 = vunpack.c.l.b16 %v373
        %v630 = vunpack.c.l.b16 %v374
        %v631 = vunpack.c.l.b16 %v375
        %v632 = vunpack.c.l.b16 %v376
        %v633 = vunpack.c.l.b16 %v377
        %v634 = vunpack.c.l.b16 %v378
        %v635 = vunpack.c.l.b16 %v379
        %v636 = vpack.c.b16 %v589, %v588
        %v637 = vpack.c.b16 %v591, %v590
        %v638 = vpack.c.b16 %v593, %v592
        %v639 = vpack.c.b16 %v595, %v594
        %v640 = vpack.c.b16 %v597, %v596
        %v641 = vpack.c.b16 %v599, %v598
        %v642 = vpack.c.b16 %v601, %v600
        %v643 = vpack.c.b16 %v603, %v602
        %v644 = vpack.c.b16 %v605, %v604
        %v645 = vpack.c.b16 %v607, %v606
        %v646 = vpack.c.b16 %v609, %v608
        %v647 = vpack.c.b16 %v611, %v610
        %v648 = vpack.c.b16 %v613, %v612
        %v649 = vpack.c.b16 %v615, %v614
        %v650 = vpack.c.b16 %v617, %v616
        %v651 = vpack.c.b16 %v619, %v618
        %v652 = vpack.c.b16 %v621, %v620
        %v653 = vpack.c.b16 %v623, %v622
        %v654 = vpack.c.b16 %v625, %v624
        %v655 = vpack.c.b16 %v627, %v626
        %v656 = vpack.c.b16 %v629, %v628
        %v657 = vpack.c.b16 %v631, %v630
        %v658 = vpack.c.b16 %v633, %v632
        %v659 = vpack.c.b16 %v635, %v634
        %684 = vmatprep.subr.bf16.mxu0 0
        %685 = vmatpush1.bf16.msra.mxu0 %v643
        %686 = vmatprep.subr.bf16.mxu0 0
        %687 = vmatpush1.bf16.msra.mxu0 %v642
        %688 = vmatprep.subr.bf16.mxu0 0
        %689 = vmatpush1.bf16.msra.mxu0 %v641
        %690 = vmatprep.subr.bf16.mxu0 0
        %691 = vmatpush1.bf16.msra.mxu0 %v640
        %692 = vmatprep.subr.bf16.mxu0 0
        %693 = vmatpush1.bf16.msra.mxu0 %v639
        %694 = vmatprep.subr.bf16.mxu0 0
        %695 = vmatpush1.bf16.msra.mxu0 %v638
        %696 = vmatprep.subr.bf16.mxu0 0
        %697 = vmatpush1.bf16.msra.mxu0 %v637
        %698 = vmatprep.subr.bf16.mxu0 0
        %699 = vmatpush1.bf16.msra.mxu0 %v636
        %700 = vmatprep.subr.bf16.mxu0 0
        %701 = vmatpush2.bf16.msra.mxu0 %v651
        %702 = vmatprep.subr.bf16.mxu0 0
        %703 = vmatpush2.bf16.msra.mxu0 %v650
        %704 = vmatprep.subr.bf16.mxu0 0
        %705 = vmatpush2.bf16.msra.mxu0 %v649
        %706 = vmatprep.subr.bf16.mxu0 0
        %707 = vmatpush2.bf16.msra.mxu0 %v648
        %708 = vmatprep.subr.bf16.mxu0 0
        %709 = vmatpush2.bf16.msra.mxu0 %v647
        %710 = vmatprep.subr.bf16.mxu0 0
        %711 = vmatpush2.bf16.msra.mxu0 %v646
        %712 = vmatprep.subr.bf16.mxu0 0
        %713 = vmatpush2.bf16.msra.mxu0 %v645
        %714 = vmatprep.subr.bf16.mxu0 0
        %715 = vmatpush2.bf16.msra.mxu0 %v644
        %716 = vmatprep.mubr.bf16.mxu0 %v481
        %717 = vmatmul.mubr.bf16.gmra.mxu0 %v480
        %v718 = vpop.f32.mrf.mxu0
        %v719 = vadd.f32 0.0, %v718
        %v720 = vpop.f32.mrf.mxu0
        %v721 = vpop.f32.mrf.mxu0
        %v722 = vadd.f32 0.0, %v721
        %v723 = vpop.f32.mrf.mxu0
        %724 = vmatprep.mubr.bf16.mxu0 %v484
        %725 = vmatmul.mubr.bf16.gmra.mxu0 %v483
        %v726 = vpop.f32.mrf.mxu0
        %v727 = vadd.f32 0.0, %v726
        %v728 = vpop.f32.mrf.mxu0
        %v729 = vpop.f32.mrf.mxu0
        %v730 = vadd.f32 0.0, %v729
        %v731 = vpop.f32.mrf.mxu0
        %732 = vmatprep.mubr.bf16.mxu0 %v487
        %733 = vmatmul.mubr.bf16.gmra.mxu0 %v486
        %v734 = vpop.f32.mrf.mxu0
        %v735 = vadd.f32 0.0, %v734
        %v736 = vpop.f32.mrf.mxu0
        %v737 = vpop.f32.mrf.mxu0
        %v738 = vadd.f32 0.0, %v737
        %v739 = vpop.f32.mrf.mxu0
        %740 = vmatprep.mubr.bf16.mxu0 %v490
        %741 = vmatmul.mubr.bf16.gmra.mxu0 %v489
        %v742 = vpop.f32.mrf.mxu0
        %v743 = vadd.f32 0.0, %v742
        %v744 = vpop.f32.mrf.mxu0
        %v745 = vpop.f32.mrf.mxu0
        %v746 = vadd.f32 0.0, %v745
        %v747 = vpop.f32.mrf.mxu0
        %748 = vmatprep.mubr.bf16.mxu0 %v493
        %749 = vmatmul.mubr.bf16.gmra.mxu0 %v492
        %v750 = vpop.f32.mrf.mxu0
        %v751 = vadd.f32 0.0, %v750
        %v752 = vpop.f32.mrf.mxu0
        %v753 = vpop.f32.mrf.mxu0
        %v754 = vadd.f32 0.0, %v753
        %v755 = vpop.f32.mrf.mxu0
        %756 = vmatprep.mubr.bf16.mxu0 %v496
        %757 = vmatmul.mubr.bf16.gmra.mxu0 %v495
        %v758 = vpop.f32.mrf.mxu0
        %v759 = vadd.f32 0.0, %v758
        %v760 = vpop.f32.mrf.mxu0
        %v761 = vpop.f32.mrf.mxu0
        %v762 = vadd.f32 0.0, %v761
        %v763 = vpop.f32.mrf.mxu0
        %764 = vmatprep.mubr.bf16.mxu0 %v499
        %765 = vmatmul.mubr.bf16.gmra.mxu0 %v498
        %v766 = vpop.f32.mrf.mxu0
        %v767 = vadd.f32 0.0, %v766
        %v768 = vpop.f32.mrf.mxu0
        %v769 = vpop.f32.mrf.mxu0
        %v770 = vadd.f32 0.0, %v769
        %v771 = vpop.f32.mrf.mxu0
        %772 = vmatprep.mubr.bf16.mxu0 %v502
        %773 = vmatmul.mubr.bf16.gmra.mxu0 %v501
        %v774 = vpop.f32.mrf.mxu0
        %v775 = vadd.f32 0.0, %v774
        %v776 = vpop.f32.mrf.mxu0
        %v777 = vpop.f32.mrf.mxu0
        %v778 = vadd.f32 0.0, %v777
        %v779 = vpop.f32.mrf.mxu0
        %780 = vmatprep.mubr.bf16.mxu0 %v505
        %781 = vmatmul.mubr.bf16.gmra.mxu0 %v504
        %v782 = vpop.f32.mrf.mxu0
        %v783 = vadd.f32 0.0, %v782
        %v784 = vpop.f32.mrf.mxu0
        %v785 = vpop.f32.mrf.mxu0
        %v786 = vadd.f32 0.0, %v785
        %v787 = vpop.f32.mrf.mxu0
        %788 = vmatprep.mubr.bf16.mxu0 %v508
        %789 = vmatmul.mubr.bf16.gmra.mxu0 %v507
        %v790 = vpop.f32.mrf.mxu0
        %v791 = vadd.f32 0.0, %v790
        %v792 = vpop.f32.mrf.mxu0
        %v793 = vpop.f32.mrf.mxu0
        %v794 = vadd.f32 0.0, %v793
        %v795 = vpop.f32.mrf.mxu0
        %796 = vdwg.mxu0
        %797 = vmatprep.subr.bf16.mxu0 0
        %798 = vmatpush1.bf16.msra.mxu0 %v659
        %799 = vmatprep.subr.bf16.mxu0 0
        %800 = vmatpush1.bf16.msra.mxu0 %v658
        %801 = vmatprep.subr.bf16.mxu0 0
        %802 = vmatpush1.bf16.msra.mxu0 %v657
        %803 = vmatprep.subr.bf16.mxu0 0
        %804 = vmatpush1.bf16.msra.mxu0 %v656
        %805 = vmatprep.subr.bf16.mxu0 0
        %806 = vmatpush1.bf16.msra.mxu0 %v655
        %807 = vmatprep.subr.bf16.mxu0 0
        %808 = vmatpush1.bf16.msra.mxu0 %v654
        %809 = vmatprep.subr.bf16.mxu0 0
        %810 = vmatpush1.bf16.msra.mxu0 %v653
        %811 = vmatprep.subr.bf16.mxu0 0
        %812 = vmatpush1.bf16.msra.mxu0 %v652
        %813 = vmatprep.subr.bf16.mxu0 0
        %814 = vmatpush2.bf16.msra.mxu0 0
        %815 = vmatprep.subr.bf16.mxu0 0
        %816 = vmatpush2.bf16.msra.mxu0 0
        %817 = vmatprep.subr.bf16.mxu0 0
        %818 = vmatpush2.bf16.msra.mxu0 0
        %819 = vmatprep.subr.bf16.mxu0 0
        %820 = vmatpush2.bf16.msra.mxu0 0
        %821 = vmatprep.subr.bf16.mxu0 0
        %822 = vmatpush2.bf16.msra.mxu0 0
        %823 = vmatprep.subr.bf16.mxu0 0
        %824 = vmatpush2.bf16.msra.mxu0 0
        %825 = vmatprep.subr.bf16.mxu0 0
        %826 = vmatpush2.bf16.msra.mxu0 0
        %827 = vmatprep.subr.bf16.mxu0 0
        %828 = vmatpush2.bf16.msra.mxu0 0
        %829 = vmatprep.mubr.bf16.mxu0 0
        %830 = vmatmul.mubr.bf16.gmra.mxu0 %v482
        %v831 = vpop.f32.mrf.mxu0
        %v832 = vadd.f32 %v719, %v831
        %v833 = vpop.f32.mrf.mxu0
        %v834 = vpop.f32.mrf.mxu0
        %v835 = vadd.f32 %v722, %v834
        %v836 = vpop.f32.mrf.mxu0
        %837 = vmatprep.mubr.bf16.mxu0 0
        %838 = vmatmul.mubr.bf16.gmra.mxu0 %v485
        %v839 = vpop.f32.mrf.mxu0
        %v840 = vadd.f32 %v727, %v839
        %v841 = vpop.f32.mrf.mxu0
        %v842 = vpop.f32.mrf.mxu0
        %v843 = vadd.f32 %v730, %v842
        %v844 = vpop.f32.mrf.mxu0
        %845 = vmatprep.mubr.bf16.mxu0 0
        %846 = vmatmul.mubr.bf16.gmra.mxu0 %v488
        %v847 = vpop.f32.mrf.mxu0
        %v848 = vadd.f32 %v735, %v847
        %v849 = vpop.f32.mrf.mxu0
        %v850 = vpop.f32.mrf.mxu0
        %v851 = vadd.f32 %v738, %v850
        %v852 = vpop.f32.mrf.mxu0
        %853 = vmatprep.mubr.bf16.mxu0 0
        %854 = vmatmul.mubr.bf16.gmra.mxu0 %v491
        %v855 = vpop.f32.mrf.mxu0
        %v856 = vadd.f32 %v743, %v855
        %v857 = vpop.f32.mrf.mxu0
        %v858 = vpop.f32.mrf.mxu0
        %v859 = vadd.f32 %v746, %v858
        %v860 = vpop.f32.mrf.mxu0
        %861 = vmatprep.mubr.bf16.mxu0 0
        %862 = vmatmul.mubr.bf16.gmra.mxu0 %v494
        %v863 = vpop.f32.mrf.mxu0
        %v864 = vadd.f32 %v751, %v863
        %v865 = vpop.f32.mrf.mxu0
        %v866 = vpop.f32.mrf.mxu0
        %v867 = vadd.f32 %v754, %v866
        %v868 = vpop.f32.mrf.mxu0
        %869 = vmatprep.mubr.bf16.mxu0 0
        %870 = vmatmul.mubr.bf16.gmra.mxu0 %v497
        %v871 = vpop.f32.mrf.mxu0
        %v872 = vadd.f32 %v759, %v871
        %v873 = vpop.f32.mrf.mxu0
        %v874 = vpop.f32.mrf.mxu0
        %v875 = vadd.f32 %v762, %v874
        %v876 = vpop.f32.mrf.mxu0
        %877 = vmatprep.mubr.bf16.mxu0 0
        %878 = vmatmul.mubr.bf16.gmra.mxu0 %v500
        %v879 = vpop.f32.mrf.mxu0
        %v880 = vadd.f32 %v767, %v879
        %v881 = vpop.f32.mrf.mxu0
        %v882 = vpop.f32.mrf.mxu0
        %v883 = vadd.f32 %v770, %v882
        %v884 = vpop.f32.mrf.mxu0
        %885 = vmatprep.mubr.bf16.mxu0 0
        %886 = vmatmul.mubr.bf16.gmra.mxu0 %v503
        %v887 = vpop.f32.mrf.mxu0
        %v888 = vadd.f32 %v775, %v887
        %v889 = vpop.f32.mrf.mxu0
        %v890 = vpop.f32.mrf.mxu0
        %v891 = vadd.f32 %v778, %v890
        %v892 = vpop.f32.mrf.mxu0
        %893 = vmatprep.mubr.bf16.mxu0 0
        %894 = vmatmul.mubr.bf16.gmra.mxu0 %v506
        %v895 = vpop.f32.mrf.mxu0
        %v896 = vadd.f32 %v783, %v895
        %v897 = vpop.f32.mrf.mxu0
        %v898 = vpop.f32.mrf.mxu0
        %v899 = vadd.f32 %v786, %v898
        %v900 = vpop.f32.mrf.mxu0
        %901 = vmatprep.mubr.bf16.mxu0 0
        %902 = vmatmul.mubr.bf16.gmra.mxu0 %v509
        %v903 = vpop.f32.mrf.mxu0
        %v904 = vadd.f32 %v791, %v903
        %v905 = vpop.f32.mrf.mxu0
        %v906 = vpop.f32.mrf.mxu0
        %v907 = vadd.f32 %v794, %v906
        %v908 = vpop.f32.mrf.mxu0
        %909 = vdwg.mxu0
        %v910 = vadd.f32 %v272, %v832
        %v911 = vadd.f32 %v273, %v835
        %v912 = vadd.f32 %v274, %v840
        %v913 = vadd.f32 %v275, %v843
        %v914 = vadd.f32 %v276, %v848
        %v915 = vadd.f32 %v277, %v851
        %v916 = vadd.f32 %v278, %v856
        %v917 = vadd.f32 %v279, %v859
        %v918 = vadd.f32 %v280, %v864
        %v919 = vadd.f32 %v281, %v867
        %v920 = vadd.f32 %v282, %v872
        %v921 = vadd.f32 %v283, %v875
        %v922 = vadd.f32 %v284, %v880
        %v923 = vadd.f32 %v285, %v883
        %v924 = vadd.f32 %v286, %v888
        %v925 = vadd.f32 %v287, %v891
        %v926 = vadd.f32 %v288, %v896
        %v927 = vadd.f32 %v289, %v899
        %v928 = vadd.f32 %v290, %v904
        %v929 = vadd.f32 %v291, %v907
        %930 = vst [vmem:[#allocation2] sm:$0xff] %v910
        %931 = vst [vmem:[#allocation2 + $0x8] sm:$0xff] %v911
        %932 = vst [vmem:[#allocation2 + $0x10] sm:$0xff] %v912
        %933 = vst [vmem:[#allocation2 + $0x18] sm:$0xff] %v913
        %934 = vst [vmem:[#allocation2 + $0x20] sm:$0xff] %v914
        %935 = vst [vmem:[#allocation2 + $0x28] sm:$0xff] %v915
        %936 = vst [vmem:[#allocation2 + $0x30] sm:$0xff] %v916
        %937 = vst [vmem:[#allocation2 + $0x38] sm:$0xff] %v917
        %938 = vst [vmem:[#allocation2 + $0x40] sm:$0xff] %v918
        %939 = vst [vmem:[#allocation2 + $0x48] sm:$0xff] %v919
        %940 = vst [vmem:[#allocation2 + $0x50] sm:$0xff] %v920
        %941 = vst [vmem:[#allocation2 + $0x58] sm:$0xff] %v921
        %942 = vst [vmem:[#allocation2 + $0x60] sm:$0xff] %v922
        %943 = vst [vmem:[#allocation2 + $0x68] sm:$0xff] %v923
        %944 = vst [vmem:[#allocation2 + $0x70] sm:$0xff] %v924
        %945 = vst [vmem:[#allocation2 + $0x78] sm:$0xff] %v925
        %946 = vst [vmem:[#allocation2 + $0x80] sm:$0xff] %v926
        %947 = vst [vmem:[#allocation2 + $0x88] sm:$0xff] %v927
        %948 = vst [vmem:[#allocation2 + $0x90] sm:$0xff] %v928
        %949 = vst [vmem:[#allocation2 + $0x98] sm:$0xff] %v929
        // Predicated region
        $region49: #{tpu_custom_call.1} parent=31 // pred_check
          %p950 = pneg %p248
        $region50: #{tpu_custom_call.1} parent=31 // pred_check_branch
          %952 = sbr.rel (%p950) target = $region52
        $region51: #{tpu_custom_call.1} parent=31 // pred_region
          %v953 = vld [vmem:[#allocation2] sm:$0xff]
          %v954 = vld [vmem:[#allocation2 + $0x8] sm:$0xff]
          %v955 = vld [vmem:[#allocation2 + $0x10] sm:$0xff]
          %v956 = vld [vmem:[#allocation2 + $0x18] sm:$0xff]
          %v957 = vld [vmem:[#allocation2 + $0x20] sm:$0xff]
          %v958 = vld [vmem:[#allocation2 + $0x28] sm:$0xff]
          %v959 = vld [vmem:[#allocation2 + $0x30] sm:$0xff]
          %v960 = vld [vmem:[#allocation2 + $0x38] sm:$0xff]
          %v961 = vld [vmem:[#allocation2 + $0x40] sm:$0xff]
          %v962 = vld [vmem:[#allocation2 + $0x48] sm:$0xff]
          %v963 = vld [vmem:[#allocation2 + $0x50] sm:$0xff]
          %v964 = vld [vmem:[#allocation2 + $0x58] sm:$0xff]
          %v965 = vld [vmem:[#allocation2 + $0x60] sm:$0xff]
          %v966 = vld [vmem:[#allocation2 + $0x68] sm:$0xff]
          %v967 = vld [vmem:[#allocation2 + $0x70] sm:$0xff]
          %v968 = vld [vmem:[#allocation2 + $0x78] sm:$0xff]
          %v969 = vld [vmem:[#allocation2 + $0x80] sm:$0xff]
          %v970 = vld [vmem:[#allocation2 + $0x88] sm:$0xff]
          %v971 = vld [vmem:[#allocation2 + $0x90] sm:$0xff]
          %v972 = vld [vmem:[#allocation2 + $0x98] sm:$0xff]
          %v973 = vpack.c.bf16 %v954, %v953
          %v974 = vpack.c.bf16 %v956, %v955
          %v975 = vpack.c.bf16 %v958, %v957
          %v976 = vpack.c.bf16 %v960, %v959
          %v977 = vpack.c.bf16 %v962, %v961
          %v978 = vpack.c.bf16 %v964, %v963
          %v979 = vpack.c.bf16 %v966, %v965
          %v980 = vpack.c.bf16 %v968, %v967
          %v981 = vpack.c.bf16 %v970, %v969
          %v982 = vpack.c.bf16 %v972, %v971
          %v983 = vld [vmem:[#allocation8] sm:$0xff]
          %v984 = vld [vmem:[#allocation8 + $0x8] sm:$0xff]
          %v985 = vld [vmem:[#allocation8 + $0x10] sm:$0xff]
          %v986 = vld [vmem:[#allocation8 + $0x18] sm:$0xff]
          %v987 = vld [vmem:[#allocation8 + $0x20] sm:$0xff]
          %v988 = vld [vmem:[#allocation8 + $0x28] sm:$0xff]
          %v989 = vld [vmem:[#allocation8 + $0x30] sm:$0xff]
          %v990 = vld [vmem:[#allocation8 + $0x38] sm:$0xff]
          %v991 = vld [vmem:[#allocation8 + $0x40] sm:$0xff]
          %v992 = vld [vmem:[#allocation8 + $0x48] sm:$0xff]
          %v993 = vld [vmem:[#allocation8 + $0x50] sm:$0xff]
          %v994 = vld [vmem:[#allocation8 + $0x58] sm:$0xff]
          %v995 = vld [vmem:[#allocation8 + $0x60] sm:$0xff]
          %v996 = vld [vmem:[#allocation8 + $0x68] sm:$0xff]
          %v997 = vld [vmem:[#allocation8 + $0x70] sm:$0xff]
          %v998 = vld [vmem:[#allocation8 + $0x78] sm:$0xff]
          %v1015 = vunpack.c.l.b16 %v983
          %v1016 = vunpack.c.h.b16 %v983
          %v1017 = vunpack.c.l.b16 %v984
          %v1018 = vunpack.c.h.b16 %v984
          %v1019 = vunpack.c.l.b16 %v985
          %v1020 = vunpack.c.h.b16 %v985
          %v1021 = vunpack.c.l.b16 %v986
          %v1022 = vunpack.c.h.b16 %v986
          %v1023 = vunpack.c.l.b16 %v987
          %v1024 = vunpack.c.h.b16 %v987
          %v1025 = vunpack.c.l.b16 %v988
          %v1026 = vunpack.c.h.b16 %v988
          %v1027 = vunpack.c.l.b16 %v989
          %v1028 = vunpack.c.h.b16 %v989
          %v1029 = vunpack.c.l.b16 %v990
          %v1030 = vunpack.c.h.b16 %v990
          %v1031 = vunpack.c.l.b16 %v991
          %v1032 = vunpack.c.h.b16 %v991
          %v1033 = vunpack.c.l.b16 %v992
          %v1034 = vunpack.c.h.b16 %v992
          %v1035 = vunpack.c.l.b16 %v993
          %v1036 = vunpack.c.h.b16 %v993
          %v1037 = vunpack.c.l.b16 %v994
          %v1038 = vunpack.c.h.b16 %v994
          %v1039 = vunpack.c.l.b16 %v995
          %v1040 = vunpack.c.h.b16 %v995
          %v1041 = vunpack.c.l.b16 %v996
          %v1042 = vunpack.c.h.b16 %v996
          %v1043 = vunpack.c.l.b16 %v997
          %v1044 = vunpack.c.h.b16 %v997
          %v1045 = vunpack.c.l.b16 %v998
          %v1046 = vunpack.c.h.b16 %v998
          %v1047 = vpack.c.b16 %v1017, %v1015
          %v1048 = vpack.c.b16 %v1018, %v1016
          %v1049 = vpack.c.b16 %v1021, %v1019
          %v1050 = vpack.c.b16 %v1022, %v1020
          %v1051 = vpack.c.b16 %v1025, %v1023
          %v1052 = vpack.c.b16 %v1026, %v1024
          %v1053 = vpack.c.b16 %v1029, %v1027
          %v1054 = vpack.c.b16 %v1030, %v1028
          %v1055 = vpack.c.b16 %v1033, %v1031
          %v1056 = vpack.c.b16 %v1034, %v1032
          %v1057 = vpack.c.b16 %v1037, %v1035
          %v1058 = vpack.c.b16 %v1038, %v1036
          %v1059 = vpack.c.b16 %v1041, %v1039
          %v1060 = vpack.c.b16 %v1042, %v1040
          %v1061 = vpack.c.b16 %v1045, %v1043
          %v1062 = vpack.c.b16 %v1046, %v1044
          %1079 = vmatprep.subr.bf16.mxu0 %v1062
          %1080 = vmatpush1.bf16.msra.mxu0 %v1061
          %1081 = vmatprep.subr.bf16.mxu0 %v1060
          %1082 = vmatpush1.bf16.msra.mxu0 %v1059
          %1083 = vmatprep.subr.bf16.mxu0 %v1058
          %1084 = vmatpush1.bf16.msra.mxu0 %v1057
          %1085 = vmatprep.subr.bf16.mxu0 %v1056
          %1086 = vmatpush1.bf16.msra.mxu0 %v1055
          %1087 = vmatprep.subr.bf16.mxu0 %v1054
          %1088 = vmatpush1.bf16.msra.mxu0 %v1053
          %1089 = vmatprep.subr.bf16.mxu0 %v1052
          %1090 = vmatpush1.bf16.msra.mxu0 %v1051
          %1091 = vmatprep.subr.bf16.mxu0 %v1050
          %1092 = vmatpush1.bf16.msra.mxu0 %v1049
          %1093 = vmatprep.subr.bf16.mxu0 %v1048
          %1094 = vmatpush1.bf16.msra.mxu0 %v1047
          %1095 = vmatprep.subr.bf16.mxu0 0
          %1096 = vmatpush2.bf16.msra.mxu0 0
          %1097 = vmatprep.subr.bf16.mxu0 0
          %1098 = vmatpush2.bf16.msra.mxu0 0
          %1099 = vmatprep.subr.bf16.mxu0 0
          %1100 = vmatpush2.bf16.msra.mxu0 0
          %1101 = vmatprep.subr.bf16.mxu0 0
          %1102 = vmatpush2.bf16.msra.mxu0 0
          %1103 = vmatprep.subr.bf16.mxu0 0
          %1104 = vmatpush2.bf16.msra.mxu0 0
          %1105 = vmatprep.subr.bf16.mxu0 0
          %1106 = vmatpush2.bf16.msra.mxu0 0
          %1107 = vmatprep.subr.bf16.mxu0 0
          %1108 = vmatpush2.bf16.msra.mxu0 0
          %1109 = vmatprep.subr.bf16.mxu0 0
          %1110 = vmatpush2.bf16.msra.mxu0 0
          %1111 = vmatprep.mubr.bf16.mxu0 0
          %1112 = vmatmul.mubr.bf16.gmra.mxu0 %v973
          %v1113 = vpop.f32.mrf.mxu0
          %v1114 = vadd.f32 0.0, %v1113
          %v1115 = vpop.f32.mrf.mxu0
          %v1116 = vadd.f32 0.0, %v1115
          %v1117 = vpop.f32.mrf.mxu0
          %v1118 = vadd.f32 0.0, %v1117
          %v1119 = vpop.f32.mrf.mxu0
          %v1120 = vadd.f32 0.0, %v1119
          %1121 = vmatprep.mubr.bf16.mxu0 0
          %1122 = vmatmul.mubr.bf16.gmra.mxu0 %v974
          %v1123 = vpop.f32.mrf.mxu0
          %v1124 = vadd.f32 0.0, %v1123
          %v1125 = vpop.f32.mrf.mxu0
          %v1126 = vadd.f32 0.0, %v1125
          %v1127 = vpop.f32.mrf.mxu0
          %v1128 = vadd.f32 0.0, %v1127
          %v1129 = vpop.f32.mrf.mxu0
          %v1130 = vadd.f32 0.0, %v1129
          %1131 = vmatprep.mubr.bf16.mxu0 0
          %1132 = vmatmul.mubr.bf16.gmra.mxu0 %v975
          %v1133 = vpop.f32.mrf.mxu0
          %v1134 = vadd.f32 0.0, %v1133
          %v1135 = vpop.f32.mrf.mxu0
          %v1136 = vadd.f32 0.0, %v1135
          %v1137 = vpop.f32.mrf.mxu0
          %v1138 = vadd.f32 0.0, %v1137
          %v1139 = vpop.f32.mrf.mxu0
          %v1140 = vadd.f32 0.0, %v1139
          %1141 = vmatprep.mubr.bf16.mxu0 0
          %1142 = vmatmul.mubr.bf16.gmra.mxu0 %v976
          %v1143 = vpop.f32.mrf.mxu0
          %v1144 = vadd.f32 0.0, %v1143
          %v1145 = vpop.f32.mrf.mxu0
          %v1146 = vadd.f32 0.0, %v1145
          %v1147 = vpop.f32.mrf.mxu0
          %v1148 = vadd.f32 0.0, %v1147
          %v1149 = vpop.f32.mrf.mxu0
          %v1150 = vadd.f32 0.0, %v1149
          %1151 = vmatprep.mubr.bf16.mxu0 0
          %1152 = vmatmul.mubr.bf16.gmra.mxu0 %v977
          %v1153 = vpop.f32.mrf.mxu0
          %v1154 = vadd.f32 0.0, %v1153
          %v1155 = vpop.f32.mrf.mxu0
          %v1156 = vadd.f32 0.0, %v1155
          %v1157 = vpop.f32.mrf.mxu0
          %v1158 = vadd.f32 0.0, %v1157
          %v1159 = vpop.f32.mrf.mxu0
          %v1160 = vadd.f32 0.0, %v1159
          %1161 = vmatprep.mubr.bf16.mxu0 0
          %1162 = vmatmul.mubr.bf16.gmra.mxu0 %v978
          %v1163 = vpop.f32.mrf.mxu0
          %v1164 = vadd.f32 0.0, %v1163
          %v1165 = vpop.f32.mrf.mxu0
          %v1166 = vadd.f32 0.0, %v1165
          %v1167 = vpop.f32.mrf.mxu0
          %v1168 = vadd.f32 0.0, %v1167
          %v1169 = vpop.f32.mrf.mxu0
          %v1170 = vadd.f32 0.0, %v1169
          %1171 = vmatprep.mubr.bf16.mxu0 0
          %1172 = vmatmul.mubr.bf16.gmra.mxu0 %v979
          %v1173 = vpop.f32.mrf.mxu0
          %v1174 = vadd.f32 0.0, %v1173
          %v1175 = vpop.f32.mrf.mxu0
          %v1176 = vadd.f32 0.0, %v1175
          %v1177 = vpop.f32.mrf.mxu0
          %v1178 = vadd.f32 0.0, %v1177
          %v1179 = vpop.f32.mrf.mxu0
          %v1180 = vadd.f32 0.0, %v1179
          %1181 = vmatprep.mubr.bf16.mxu0 0
          %1182 = vmatmul.mubr.bf16.gmra.mxu0 %v980
          %v1183 = vpop.f32.mrf.mxu0
          %v1184 = vadd.f32 0.0, %v1183
          %v1185 = vpop.f32.mrf.mxu0
          %v1186 = vadd.f32 0.0, %v1185
          %v1187 = vpop.f32.mrf.mxu0
          %v1188 = vadd.f32 0.0, %v1187
          %v1189 = vpop.f32.mrf.mxu0
          %v1190 = vadd.f32 0.0, %v1189
          %1191 = vmatprep.mubr.bf16.mxu0 0
          %1192 = vmatmul.mubr.bf16.gmra.mxu0 %v981
          %v1193 = vpop.f32.mrf.mxu0
          %v1194 = vadd.f32 0.0, %v1193
          %v1195 = vpop.f32.mrf.mxu0
          %v1196 = vadd.f32 0.0, %v1195
          %v1197 = vpop.f32.mrf.mxu0
          %v1198 = vadd.f32 0.0, %v1197
          %v1199 = vpop.f32.mrf.mxu0
          %v1200 = vadd.f32 0.0, %v1199
          %1201 = vmatprep.mubr.bf16.mxu0 0
          %1202 = vmatmul.mubr.bf16.gmra.mxu0 %v982
          %v1203 = vpop.f32.mrf.mxu0
          %v1204 = vadd.f32 0.0, %v1203
          %v1205 = vpop.f32.mrf.mxu0
          %v1206 = vadd.f32 0.0, %v1205
          %v1207 = vpop.f32.mrf.mxu0
          %v1208 = vadd.f32 0.0, %v1207
          %v1209 = vpop.f32.mrf.mxu0
          %v1210 = vadd.f32 0.0, %v1209
          %1211 = vdwg.mxu0
          %1212 = vst [vmem:[%s242] sm:$0xff] %v1114
          %1213 = vst [vmem:[%s242 + $0x8] sm:$0xff] %v1116
          %1214 = vst [vmem:[%s242 + $0x10] sm:$0xff] %v1118
          %1215 = vst [vmem:[%s242 + $0x18] sm:$0xff] %v1120
          %1216 = vst [vmem:[%s242 + $0x20] sm:$0xff] %v1124
          %1217 = vst [vmem:[%s242 + $0x28] sm:$0xff] %v1126
          %1218 = vst [vmem:[%s242 + $0x30] sm:$0xff] %v1128
          %1219 = vst [vmem:[%s242 + $0x38] sm:$0xff] %v1130
          %1220 = vst [vmem:[%s242 + $0x40] sm:$0xff] %v1134
          %1221 = vst [vmem:[%s242 + $0x48] sm:$0xff] %v1136
          %1222 = vst [vmem:[%s242 + $0x50] sm:$0xff] %v1138
          %1223 = vst [vmem:[%s242 + $0x58] sm:$0xff] %v1140
          %1224 = vst [vmem:[%s242 + $0x60] sm:$0xff] %v1144
          %1225 = vst [vmem:[%s242 + $0x68] sm:$0xff] %v1146
          %1226 = vst [vmem:[%s242 + $0x70] sm:$0xff] %v1148
          %1227 = vst [vmem:[%s242 + $0x78] sm:$0xff] %v1150
          %1228 = vst [vmem:[%s242 + $0x80] sm:$0xff] %v1154
          %1229 = vst [vmem:[%s242 + $0x88] sm:$0xff] %v1156
          %1230 = vst [vmem:[%s242 + $0x90] sm:$0xff] %v1158
          %1231 = vst [vmem:[%s242 + $0x98] sm:$0xff] %v1160
          %1232 = vst [vmem:[%s242 + $0xa0] sm:$0xff] %v1164
          %1233 = vst [vmem:[%s242 + $0xa8] sm:$0xff] %v1166
          %1234 = vst [vmem:[%s242 + $0xb0] sm:$0xff] %v1168
          %1235 = vst [vmem:[%s242 + $0xb8] sm:$0xff] %v1170
          %1236 = vst [vmem:[%s242 + $0xc0] sm:$0xff] %v1174
          %1237 = vst [vmem:[%s242 + $0xc8] sm:$0xff] %v1176
          %1238 = vst [vmem:[%s242 + $0xd0] sm:$0xff] %v1178
          %1239 = vst [vmem:[%s242 + $0xd8] sm:$0xff] %v1180
          %1240 = vst [vmem:[%s242 + $0xe0] sm:$0xff] %v1184
          %1241 = vst [vmem:[%s242 + $0xe8] sm:$0xff] %v1186
          %1242 = vst [vmem:[%s242 + $0xf0] sm:$0xff] %v1188
          %1243 = vst [vmem:[%s242 + $0xf8] sm:$0xff] %v1190
          %1244 = vst [vmem:[%s242 + $0x100] sm:$0xff] %v1194
          %1245 = vst [vmem:[%s242 + $0x108] sm:$0xff] %v1196
          %1246 = vst [vmem:[%s242 + $0x110] sm:$0xff] %v1198
          %1247 = vst [vmem:[%s242 + $0x118] sm:$0xff] %v1200
          %1248 = vst [vmem:[%s242 + $0x120] sm:$0xff] %v1204
          %1249 = vst [vmem:[%s242 + $0x128] sm:$0xff] %v1206
          %1250 = vst [vmem:[%s242 + $0x130] sm:$0xff] %v1208
          %1251 = vst [vmem:[%s242 + $0x138] sm:$0xff] %v1210
        $region52: #{tpu_custom_call.1} parent=31 // pred_fallthru
          _
        %s1252 = sand.u32 %s116, 1
        %s1253 = scalar_lea.sflag [#allocation5], %s1252
        %s1254 = sand.u32 %s116, 1
        %s1255 = smul.addr %s1254, 320
        %s1256 = scalar_lea.vmem [#allocation9], %s1255
        // Predicated region
        $region53: #{tpu_custom_call.1} parent=31 // pred_check
          %p1257 = pneg %p126
        $region54: #{tpu_custom_call.1} parent=31 // pred_check_branch
          %1259 = sbr.rel (%p1257) target = $region56
        $region55: #{tpu_custom_call.1} parent=31 // pred_region
          %s1260 = smul.u32 20, %s25
          %s1262 = ssub.s32 5120, 5120
          %1263 = vsyncadd %s1253, %s1262
          %s1264 = smul.addr %s1260, 2
          %s1265 = smul.addr %s1264, 128
          %s1266 = scalar_lea.hbm %s3, %s1265
          %s1267 = sshll.u32 %s1256, 4
          %s1268 = int_to_ptr.vmem [resolvable:$true] %s1267
          %1273 = dma.vmem_to_hbm [thread:$0]  %s1268, 5120, %s1266, %s1253, 256, 256, 16
        $region56: #{tpu_custom_call.1} parent=31 // pred_fallthru
          _
      $region32: #{tpu_custom_call.1} parent=5 // pred_fallthru
        _
      %p1274 = scmp.le.s32.totalorder 2, %s16
      // Predicated region
      $region57: #{tpu_custom_call.1} parent=5 // pred_check
        %p1275 = pneg %p1274
      $region58: #{tpu_custom_call.1} parent=5 // pred_check_branch
        %1277 = sbr.rel (%p1275) target = $region60
      $region59: #{tpu_custom_call.1} parent=5 // pred_region
        %s1278 = ssub.s32 %s16, 2
        // Predicated region
        $region61: #{tpu_custom_call.1} parent=59 // pred_check
          %p1279 = pneg %p132
        $region62: #{tpu_custom_call.1} parent=59 // pred_check_branch
          %1281 = sbr.rel (%p1279) target = $region64
        $region63: #{tpu_custom_call.1} parent=59 // pred_region
          %s1282 = sand.u32 %s117, 1
          %s1283 = scalar_lea.sflag [#allocation5], %s1282
          %s1284 = sand.u32 %s117, 1
          %s1285 = smul.addr %s1284, 320
          %s1286 = scalar_lea.vmem [#allocation9], %s1285
          %1287 = dma.done %s1283, 5120
        $region64: #{tpu_custom_call.1} parent=59 // pred_fallthru
          _
      $region60: #{tpu_custom_call.1} parent=5 // pred_fallthru
        _
    $region6: #{tpu_custom_call.1} parent=1 // loop_footer
      %s20 = sadd.s32 1, %s16
    $region7: #{tpu_custom_call.1} parent=1 // loop_footer_branch
      %15 = sbr.rel target = $region3
    $region8: #{tpu_custom_call.1} parent=1 // loop_exit
      _
    %1288 = vsyncpa [#allocation4], 1
    %s1289 = scalar_lea.sflag [#allocation4], 1
    %1290 = vsyncpa %s1289, 1
    %1291 = vsyncpa [#allocation7], 1
    %1292 = vsyncpa [#allocation5], 1
    %s1293 = scalar_lea.sflag [#allocation5], 1
    %1294 = vsyncpa %s1293, 1

</llo_original>
